<compile_context>
chip_gen: v6e
topology: v6e:2x2x1
jax: 0.10.0
libtpu: 0.0.40
codegen_flags: <defaults>
</compile_context>

<pallas_src>
import functools
import math

import jax
import jax.numpy as jnp
from jax.experimental import pallas as pl
from jax.experimental.pallas import tpu as pltpu

EPS = 1e-5
_SEG_LANES = 128                      # segment axis padded to one full vreg of lanes
_TARGET_IO_BYTES_PER_STEP = 8 << 20   # ~8 MiB of HBM traffic (in + out) per grid step
_MAX_PACKED_WIDTH = 8192              # max W = G*C for the lane-packed path
_MIN_GRID_STEPS = 4                   # keep some steps for pipelining / megacore


# --------------------------------------------------------------------------- #
# Kernels
# --------------------------------------------------------------------------- #
def _ln_rowwise_kernel(x_ref, w_ref, o_ref):
    """Plain path (C % 128 == 0 or packing not applicable).

    x_ref (T, C), w_ref (1, C), o_ref (T, C); reduction over lanes (XLU).
    Two-pass variance (about the mean) avoids E[x^2]-E[x]^2 cancellation.
    """
    x = x_ref[...].astype(jnp.float32)
    w = w_ref[...].astype(jnp.float32)
    inv_c = 1.0 / x_ref.shape[-1]
    mu = jnp.sum(x, axis=-1, keepdims=True) * inv_c
    d = x - mu
    var = jnp.sum(d * d, axis=-1, keepdims=True) * inv_c
    inv = jax.lax.rsqrt(var + EPS)
    # NOTE: the original module does NOT subtract the mean from the output.
    o_ref[...] = (x * inv * w).astype(o_ref.dtype)


def _split_dot(v, seg01):
    """f32 (T,K) @ exact-0/1 bf16 (K,N) -> f32 (T,N), ~16-bit-accurate in v.

    Two bf16 MXU passes (hi + lo halves of v) with f32 accumulation: ~3x fewer
    MXU passes than Precision.HIGHEST and far more accurate than a single
    DEFAULT-precision bf16 pass.  The 0/1 matrix is exactly representable in
    bf16, so all the rounding error comes from v's split (~2^-16 relative).
    """
    hi = v.astype(jnp.bfloat16)
    lo = (v - hi.astype(jnp.float32)).astype(jnp.bfloat16)
    out = jnp.dot(hi, seg01, preferred_element_type=jnp.float32)
    out = out + jnp.dot(lo, seg01, preferred_element_type=jnp.float32)
    return out


def _ln_packed_kernel(x_ref, w_ref, m_ref, mt_ref, o_ref, *, inv_c):
    """Lane-dense path for C % 128 != 0.

    Each physical row of x_ref (T, W), W = G*C, holds G independent logical rows
    of length C laid out contiguously along lanes (loads, stores and VPU work use
    all lanes; stores are unmasked vst).
      m_ref  (W, 128) bf16: column g is 1 on the lanes of segment g (0 elsewhere,
                            columns >= G all zero) -> x @ m gives per-segment sums.
      mt_ref (128, W) bf16: row g is 1 on the lanes of segment g -> broadcasts a
                            per-segment scalar back to full width.
    Statistics use a two-pass variance about the mean; the 1/C scale is applied
    on the VPU after the dot.  8 bf16 MXU passes per block total -> HBM-bound on
    v6e/v7x (borderline on v5e; drop the hi/lo split on the mu stages there if a
    profile shows the MXU binding).
    """
    x = x_ref[...].astype(jnp.float32)             # (T, W)
    w = w_ref[...].astype(jnp.float32)             # (1, W)
    m = m_ref[...]                                 # (W, 128) exact 0/1 bf16
    mt = mt_ref[...]                               # (128, W) exact 0/1 bf16

    mu_seg = _split_dot(x, m) * inv_c              # (T, 128) per-segment mean
    mu = _split_dot(mu_seg, mt)                    # (T, W)   broadcast back
    d = x - mu
    var_seg = _split_dot(d * d, m) * inv_c         # (T, 128) two-pass variance
    inv_seg = jax.lax.rsqrt(var_seg + EPS)         # lanes >= G hold rsqrt(eps);
    inv = _split_dot(inv_seg, mt)                  # they never reach the output
    # NOTE: the original module does NOT subtract the mean from the output.
    o_ref[...] = (x * inv * w).astype(o_ref.dtype)


# --------------------------------------------------------------------------- #
# Launch helpers
# --------------------------------------------------------------------------- #
_VMEM_LIMIT_CACHE = []
_SEG_MATRIX_CACHE = {}


def _vmem_limit_bytes():
    """3/4 of physical VMEM, capped at 96 MiB.

    -> 96 MiB on v5e / v6e (128 MiB physical), 48 MiB on v7x (64 MiB per TC).
    """
    if not _VMEM_LIMIT_CACHE:
        try:
            cap = int(pltpu.get_tpu_info().vmem_capacity_bytes)
        except Exception:
            try:
                kind = jax.devices()[0].device_kind.lower()
                cap = (64 << 20) if "v7" in kind else (128 << 20)
            except Exception:
                cap = 64 << 20
        _VMEM_LIMIT_CACHE.append(min((3 * cap) // 4, 96 << 20))
    return _VMEM_LIMIT_CACHE[0]


def _segment_matrices(c, g):
    """Exact 0/1 bf16 segment-sum / broadcast matrices, cached per (C, G)."""
    key = (c, g)
    if key not in _SEG_MATRIX_CACHE:
        w = g * c
        seg = jnp.arange(w, dtype=jnp.int32) // c            # segment id per lane
        lane = jnp.arange(_SEG_LANES, dtype=jnp.int32)
        m = (seg[:, None] == lane[None, :]).astype(jnp.bfloat16)    # (W, 128)
        mt = (lane[:, None] == seg[None, :]).astype(jnp.bfloat16)   # (128, W)
        _SEG_MATRIX_CACHE[key] = (m, mt)
    return _SEG_MATRIX_CACHE[key]


def _pick_tile_rows(n_rows, width, itemsize, vmem_limit):
    """Row-tile size for this mem-bound op.

    Targets ~_TARGET_IO_BYTES_PER_STEP of HBM traffic (in + out) per grid step,
    sized against the actual I/O dtype; bounded by a conservative VMEM estimate
    (double-buffered I/O blocks + ~5 full-block f32 intermediates, in case the
    compiler materialises them); keeps >= _MIN_GRID_STEPS steps when there are
    enough rows; rows a multiple of 8 (sublane-clean); grid length even when
    cheaply possible (v7x megacore balance).
    """
    padded_w = pl.cdiv(width, 128) * 128           # lane dim pads to 128 in VMEM
    t_io = _TARGET_IO_BYTES_PER_STEP // (2 * padded_w * itemsize)
    per_row_bytes = 4 * padded_w * itemsize + 5 * padded_w * 4
    const_bytes = 2 * (width * _SEG_LANES * 2) * 2  # double-buffered seg matrices
    budget = max((vmem_limit * 3) // 4 - const_bytes, per_row_bytes * 8)
    t_vmem = budget // per_row_bytes
    t = max(8, min(t_io, t_vmem))
    if n_rows >= _MIN_GRID_STEPS * 8:
        t = min(t, pl.cdiv(n_rows, _MIN_GRID_STEPS))
    t = max(8, (t // 8) * 8)
    if t >= n_rows:
        return n_rows                               # single block (full dim is legal)
    steps = pl.cdiv(n_rows, t)
    if steps % 2 == 1:                              # best-effort even grid length
        for s in (steps + 1, steps + 3):
            cand = max(8, ((pl.cdiv(n_rows, s) + 7) // 8) * 8)
            if cand <= t and pl.cdiv(n_rows, cand) % 2 == 0:
                return cand
    return t


def _launch(kernel, args, extra_specs, n_rows, width, out_dtype, tile_rows, itemsize):
    vmem_limit = _vmem_limit_bytes()
    t = tile_rows if tile_rows is not None else _pick_tile_rows(
        n_rows, width, itemsize, vmem_limit)
    t = min(t, n_rows)
    grid = (pl.cdiv(n_rows, t),)                    # ragged last block: OOB rows are
                                                    # computed but never written back
    x_spec = pl.BlockSpec((t, width), lambda i: (i, 0))
    o_spec = pl.BlockSpec((t, width), lambda i: (i, 0))
    return pl.pallas_call(
        kernel,
        out_shape=jax.ShapeDtypeStruct((n_rows, width), out_dtype),
        grid_spec=pltpu.PrefetchScalarGridSpec(
            num_scalar_prefetch=0,
            grid=grid,
            in_specs=[x_spec] + extra_specs,
            out_specs=o_spec,
        ),
        compiler_params=pltpu.CompilerParams(
            dimension_semantics=("parallel",),      # rows shard across TCs (v7x)
            vmem_limit_bytes=vmem_limit,
        ),
    )(*args)


def _launch_rowwise(x2d, weight, tile_rows, itemsize):
    rows, c = x2d.shape
    w2d = weight.reshape(1, c)
    extra = [pl.BlockSpec((1, c), lambda i: (0, 0))]          # invariant block
    return _launch(_ln_rowwise_kernel, (x2d, w2d), extra,
                   rows, c, x2d.dtype, tile_rows, itemsize)


def _launch_packed(x2d, weight, g, tile_rows, itemsize):
    rows, c = x2d.shape
    w = g * c
    xp = x2d.reshape(rows // g, w)                            # free, contiguous reshape
    wp = jnp.tile(weight, g).reshape(1, w)
    m, mt = _segment_matrices(c, g)
    kernel = functools.partial(_ln_packed_kernel, inv_c=1.0 / c)
    extra = [
        pl.BlockSpec((1, w), lambda i: (0, 0)),               # invariant blocks: the
        pl.BlockSpec((w, _SEG_LANES), lambda i: (0, 0)),      # pipeline fetches them
        pl.BlockSpec((_SEG_LANES, w), lambda i: (0, 0)),      # once, not per step
    ]
    out = _launch(kernel, (xp, wp, m, mt), extra,
                  rows // g, w, x2d.dtype, tile_rows, itemsize)
    return out.reshape(rows, c)


def _pick_packing(rows, c):
    """Lane-packing factor G (power of two).  G rows of length C share one
    physical row of width W = G*C so loads/stores use (nearly) all 128 lanes.
    Falls back to smaller G (still lane-denser than rowwise) if the full packing
    factor does not divide the row count."""
    if c % 128 == 0 or c > 1024:
        return 1
    g = 128 // math.gcd(c, 128)
    while g > 1:
        if g * c <= _MAX_PACKED_WIDTH and rows % g == 0:
            return g
        g //= 2
    return 1


def biasfree_layernorm(x, weight, *, tile_rows=None):
    """BiasFree LayerNorm over the last axis.  x: (..., C), weight: (C,)."""
    orig_shape = x.shape
    c = orig_shape[-1]
    assert weight.shape == (c,), (weight.shape, c)
    x2d = x.reshape(-1, c)
    rows = x2d.shape[0]
    itemsize = x2d.dtype.itemsize

    g = _pick_packing(rows, c)
    if g > 1:
        out = _launch_packed(x2d, weight, g, tile_rows, itemsize)
    else:
        out = _launch_rowwise(x2d, weight, tile_rows, itemsize)
    return out.reshape(orig_shape)


# --------------------------------------------------------------------------- #
# Self-test
# --------------------------------------------------------------------------- #
if __name__ == "__main__":
    key = jax.random.PRNGKey(0)
    k1, k2, k3, k4 = jax.random.split(key, 4)

    def reference(x, w):
        xf = x.astype(jnp.float32)
        mu = jnp.mean(xf, axis=-1, keepdims=True)
        var = jnp.mean((xf - mu) ** 2, axis=-1, keepdims=True)
        return (xf / jnp.sqrt(var + EPS) * w.astype(jnp.float32)).astype(x.dtype)

    # (a) Restormer-style (B, H*W, C) with C=48: lane-packed path (G=8, W=384),
    #     f32 I/O, nonzero mean to exercise the two-pass variance.
    x_a = jax.random.normal(k1, (2, 256, 48), dtype=jnp.float32) + 2.5
    w_a = 1.0 + 0.1 * jax.random.normal(k2, (48,), dtype=jnp.float32)
    y_a = jax.block_until_ready(biasfree_layernorm(x_a, w_a))
    assert jnp.allclose(y_a, reference(x_a, w_a), atol=1e-3, rtol=1e-3), "packed f32 mismatch"

    # (b) C multiple of 128: plain row-wise path, bf16 I/O (HBM traffic halved).
    x_b = jax.random.normal(k3, (2, 64, 128), dtype=jnp.float32).astype(jnp.bfloat16)
    w_b = (1.0 + 0.1 * jax.random.normal(k4, (128,), dtype=jnp.float32)).astype(jnp.bfloat16)
    y_b = jax.block_until_ready(biasfree_layernorm(x_b, w_b))
    assert jnp.allclose(y_b.astype(jnp.float32),
                        reference(x_b, w_b).astype(jnp.float32),
                        atol=3e-2, rtol=3e-2), "rowwise bf16 mismatch"

    # (c) Ragged last block: row count not a multiple of the tile size (no padding).
    x_c = jax.random.normal(k1, (1, 20, 128), dtype=jnp.float32)
    w_c = 1.0 + 0.1 * jax.random.normal(k2, (128,), dtype=jnp.float32)
    y_c = jax.block_until_ready(biasfree_layernorm(x_c, w_c, tile_rows=8))
    assert jnp.allclose(y_c, reference(x_c, w_c), atol=2e-5, rtol=2e-5), "ragged mismatch"

    # (d) rows % 8 != 0 but rows % 4 == 0: smaller packing factor fallback (G=4, W=192).
    x_d = jax.random.normal(k3, (2, 6, 48), dtype=jnp.float32) + 1.0
    w_d = 1.0 + 0.1 * jax.random.normal(k4, (48,), dtype=jnp.float32)
    y_d = jax.block_until_ready(biasfree_layernorm(x_d, w_d))
    assert jnp.allclose(y_d, reference(x_d, w_d), atol=1e-3, rtol=1e-3), "packed fallback mismatch"

    print("KERNEL_OK")
</pallas_src>

<mosaic_0001>
module attributes {stable_mosaic.version = 11 : i64} {
  func.func @_ln_packed_kernel(%arg0: i32, %arg1: memref<16x384xf32, #tpu.memory_space<vmem>>, %arg2: memref<1x384xf32, #tpu.memory_space<vmem>>, %arg3: memref<384x128xbf16, #tpu.memory_space<vmem>>, %arg4: memref<128x384xbf16, #tpu.memory_space<vmem>>, %arg5: memref<16x384xf32, #tpu.memory_space<vmem>>) attributes {dimension_semantics = [#tpu.dimension_semantics<parallel>], iteration_bounds = array<i64: 4>, scalar_prefetch = 0 : i64, scratch_operands = 0 : i64, tpu.core_type = #tpu.core_type<tc>, window_params = [{transform_indices = @transform_0, window_bounds = array<i64: 16, 384>}, {pipeline_mode = #tpu.pipeline_mode<synchronous>, transform_indices = @transform_1, window_bounds = array<i64: 1, 384>}, {pipeline_mode = #tpu.pipeline_mode<synchronous>, transform_indices = @transform_2, window_bounds = array<i64: 384, 128>}, {pipeline_mode = #tpu.pipeline_mode<synchronous>, transform_indices = @transform_3, window_bounds = array<i64: 128, 384>}, {transform_indices = @transform_4, window_bounds = array<i64: 16, 384>}]} {
    %c0 = arith.constant 0 : index
    %c0_0 = arith.constant 0 : index
    %0 = vector.load %arg1[%c0, %c0_0] : memref<16x384xf32, #tpu.memory_space<vmem>>, vector<16x384xf32>
    %c0_1 = arith.constant 0 : index
    %c0_2 = arith.constant 0 : index
    %1 = vector.load %arg2[%c0_1, %c0_2] : memref<1x384xf32, #tpu.memory_space<vmem>>, vector<1x384xf32>
    %c0_3 = arith.constant 0 : index
    %c0_4 = arith.constant 0 : index
    %2 = vector.load %arg3[%c0_3, %c0_4] : memref<384x128xbf16, #tpu.memory_space<vmem>>, vector<384x128xbf16>
    %c0_5 = arith.constant 0 : index
    %c0_6 = arith.constant 0 : index
    %3 = vector.load %arg4[%c0_5, %c0_6] : memref<128x384xbf16, #tpu.memory_space<vmem>>, vector<128x384xbf16>
    %4 = arith.truncf %0 : vector<16x384xf32> to vector<16x384xbf16>
    %5 = arith.extf %4 : vector<16x384xbf16> to vector<16x384xf32>
    %6 = arith.subf %0, %5 : vector<16x384xf32>
    %7 = arith.truncf %6 : vector<16x384xf32> to vector<16x384xbf16>
    %cst = arith.constant dense<0.000000e+00> : vector<16x128xf32>
    %8 = tpu.matmul %4, %2, %cst {dimension_numbers = #tpu.dot_dimension_numbers<[1], [0], [0], [1], [0, 0, 1, 1], [], []>} : vector<16x384xbf16>, vector<384x128xbf16>, vector<16x128xf32> -> vector<16x128xf32>
    %cst_7 = arith.constant dense<0.000000e+00> : vector<16x128xf32>
    %9 = tpu.matmul %7, %2, %cst_7 {dimension_numbers = #tpu.dot_dimension_numbers<[1], [0], [0], [1], [0, 0, 1, 1], [], []>} : vector<16x384xbf16>, vector<384x128xbf16>, vector<16x128xf32> -> vector<16x128xf32>
    %10 = arith.addf %8, %9 : vector<16x128xf32>
    %cst_8 = arith.constant 0.020833334 : f32
    %11 = vector.broadcast %cst_8 : f32 to vector<16x128xf32>
    %12 = arith.mulf %10, %11 : vector<16x128xf32>
    %13 = arith.truncf %12 : vector<16x128xf32> to vector<16x128xbf16>
    %14 = arith.extf %13 : vector<16x128xbf16> to vector<16x128xf32>
    %15 = arith.subf %12, %14 : vector<16x128xf32>
    %16 = arith.truncf %15 : vector<16x128xf32> to vector<16x128xbf16>
    %cst_9 = arith.constant dense<0.000000e+00> : vector<16x384xf32>
    %17 = tpu.matmul %13, %3, %cst_9 {dimension_numbers = #tpu.dot_dimension_numbers<[1], [0], [0], [1], [0, 0, 1, 1], [], []>} : vector<16x128xbf16>, vector<128x384xbf16>, vector<16x384xf32> -> vector<16x384xf32>
    %cst_10 = arith.constant dense<0.000000e+00> : vector<16x384xf32>
    %18 = tpu.matmul %16, %3, %cst_10 {dimension_numbers = #tpu.dot_dimension_numbers<[1], [0], [0], [1], [0, 0, 1, 1], [], []>} : vector<16x128xbf16>, vector<128x384xbf16>, vector<16x384xf32> -> vector<16x384xf32>
    %19 = arith.addf %17, %18 : vector<16x384xf32>
    %20 = arith.subf %0, %19 : vector<16x384xf32>
    %21 = arith.mulf %20, %20 : vector<16x384xf32>
    %22 = arith.truncf %21 : vector<16x384xf32> to vector<16x384xbf16>
    %23 = arith.extf %22 : vector<16x384xbf16> to vector<16x384xf32>
    %24 = arith.subf %21, %23 : vector<16x384xf32>
    %25 = arith.truncf %24 : vector<16x384xf32> to vector<16x384xbf16>
    %cst_11 = arith.constant dense<0.000000e+00> : vector<16x128xf32>
    %26 = tpu.matmul %22, %2, %cst_11 {dimension_numbers = #tpu.dot_dimension_numbers<[1], [0], [0], [1], [0, 0, 1, 1], [], []>} : vector<16x384xbf16>, vector<384x128xbf16>, vector<16x128xf32> -> vector<16x128xf32>
    %cst_12 = arith.constant dense<0.000000e+00> : vector<16x128xf32>
    %27 = tpu.matmul %25, %2, %cst_12 {dimension_numbers = #tpu.dot_dimension_numbers<[1], [0], [0], [1], [0, 0, 1, 1], [], []>} : vector<16x384xbf16>, vector<384x128xbf16>, vector<16x128xf32> -> vector<16x128xf32>
    %28 = arith.addf %26, %27 : vector<16x128xf32>
    %cst_13 = arith.constant 0.020833334 : f32
    %29 = vector.broadcast %cst_13 : f32 to vector<16x128xf32>
    %30 = arith.mulf %28, %29 : vector<16x128xf32>
    %cst_14 = arith.constant 9.99999974E-6 : f32
    %31 = vector.broadcast %cst_14 : f32 to vector<16x128xf32>
    %32 = arith.addf %30, %31 : vector<16x128xf32>
    %33 = math.rsqrt %32 : vector<16x128xf32>
    %34 = arith.truncf %33 : vector<16x128xf32> to vector<16x128xbf16>
    %35 = arith.extf %34 : vector<16x128xbf16> to vector<16x128xf32>
    %36 = arith.subf %33, %35 : vector<16x128xf32>
    %37 = arith.truncf %36 : vector<16x128xf32> to vector<16x128xbf16>
    %cst_15 = arith.constant dense<0.000000e+00> : vector<16x384xf32>
    %38 = tpu.matmul %34, %3, %cst_15 {dimension_numbers = #tpu.dot_dimension_numbers<[1], [0], [0], [1], [0, 0, 1, 1], [], []>} : vector<16x128xbf16>, vector<128x384xbf16>, vector<16x384xf32> -> vector<16x384xf32>
    %cst_16 = arith.constant dense<0.000000e+00> : vector<16x384xf32>
    %39 = tpu.matmul %37, %3, %cst_16 {dimension_numbers = #tpu.dot_dimension_numbers<[1], [0], [0], [1], [0, 0, 1, 1], [], []>} : vector<16x128xbf16>, vector<128x384xbf16>, vector<16x384xf32> -> vector<16x384xf32>
    %40 = arith.addf %38, %39 : vector<16x384xf32>
    %41 = arith.mulf %0, %40 : vector<16x384xf32>
    %42 = vector.broadcast %1 : vector<1x384xf32> to vector<16x384xf32>
    %43 = arith.mulf %41, %42 : vector<16x384xf32>
    %c0_17 = arith.constant 0 : index
    %c0_18 = arith.constant 0 : index
    %44 = vector.load %arg5[%c0_17, %c0_18] : memref<16x384xf32, #tpu.memory_space<vmem>>, vector<16x384xf32>
    tpu.vector_store %arg5[%c0_17, %c0_18], %43 {strides = array<i32>} : memref<16x384xf32, #tpu.memory_space<vmem>>, vector<16x384xf32>,
    return
  }
  func.func @transform_0(%arg0: i32) -> (i32, i32) {
    %c0_i32 = arith.constant 0 : i32
    %c0_i32_0 = arith.constant 0 : i32
    return %arg0, %c0_i32 : i32, i32
  }
  func.func @transform_1(%arg0: i32) -> (i32, i32) {
    %c0_i32 = arith.constant 0 : i32
    %c0_i32_0 = arith.constant 0 : i32
    %c0_i32_1 = arith.constant 0 : i32
    return %c0_i32, %c0_i32_0 : i32, i32
  }
  func.func @transform_2(%arg0: i32) -> (i32, i32) {
    %c0_i32 = arith.constant 0 : i32
    %c0_i32_0 = arith.constant 0 : i32
    %c0_i32_1 = arith.constant 0 : i32
    return %c0_i32, %c0_i32_0 : i32, i32
  }
  func.func @transform_3(%arg0: i32) -> (i32, i32) {
    %c0_i32 = arith.constant 0 : i32
    %c0_i32_0 = arith.constant 0 : i32
    %c0_i32_1 = arith.constant 0 : i32
    return %c0_i32, %c0_i32_0 : i32, i32
  }
  func.func @transform_4(%arg0: i32) -> (i32, i32) {
    %c0_i32 = arith.constant 0 : i32
    %c0_i32_0 = arith.constant 0 : i32
    return %arg0, %c0_i32 : i32, i32
  }
}

</mosaic_0001>

<llo_original>
// kernel: tpu_custom_call.1
$region0: #{tpu_custom_call.1}
  #allocation0 [shape = 'u32[]', space=smem, size = 0x4, offset = 0x4, fixed_abs, tag = 'smem constant byte address 0x4 - core index']
  #allocation1 [shape = 'u32[144,128]{1,0:T(1,128)}', space=vmem, size = 0x12000, scoped, tag = 'internal scratch']
  %s0 = inlined_call_operand.hbm [shape: f32[64,384], index: 0, kind: input, shape index: {}]
  %s1 = inlined_call_operand.hbm [shape: f32[1,384], index: 1, kind: input, shape index: {}]
  %s2 = inlined_call_operand.hbm [shape: bf16[384,128], index: 2, kind: input, shape index: {}]
  %s3 = inlined_call_operand.hbm [shape: bf16[128,384], index: 3, kind: input, shape index: {}]
  %s4 = inlined_call_operand.hbm [shape: f32[64,384], index: 4, kind: output, shape index: {}]
  %s5 = sld [smem:[#allocation0]]
  $region65: #{tpu_custom_call.1} parent=0
    _
  %s7 = ssub.s32 1, %s5
  %s8 = scalar_select 0, %s7, %s5
  $region1: #{tpu_custom_call.1} parent=0
    #allocation2 [shape = 'u8[49152]{0}', space=vmem, size = 0xc000, scoped, tag = 'input window, operand 0']
    #allocation3 [shape = 's32[2]{0}', space=sflag, size = 0x8, scoped, tag = 'scoped memory for tpu_custom_call.1']
    #allocation4 [shape = 's32[2]{0}', space=sflag, size = 0x8, scoped, tag = 'scoped memory for tpu_custom_call.1']
    #allocation5 [shape = 'u8[1536]{0}', space=vmem, size = 0x800, scoped, tag = 'input window, operand 1, single buffered']
    #allocation6 [shape = 's32[1]{0}', space=sflag, size = 0x4, scoped, tag = 'scoped memory for tpu_custom_call.1']
    #allocation7 [shape = 'u8[98304]{0}', space=vmem, size = 0x18000, scoped, tag = 'input window, operand 2, single buffered']
    #allocation8 [shape = 'u8[98304]{0}', space=vmem, size = 0x18000, scoped, tag = 'input window, operand 3, single buffered']
    #allocation9 [shape = 's32[1]{0}', space=sflag, size = 0x4, scoped, tag = 'scoped memory for tpu_custom_call.1']
    #allocation10 [shape = 'u8[49152]{0}', space=vmem, size = 0xc000, scoped, tag = 'output window, operand 0']
    %9 = vsyncpa [#allocation3], 0
    %s10 = scalar_lea.sflag [#allocation3], 1
    %11 = vsyncpa %s10, 0
    %12 = vsyncpa [#allocation6], 0
    %13 = vsyncpa [#allocation9], 0
    %14 = vsyncpa [#allocation4], 0
    %s15 = scalar_lea.sflag [#allocation4], 1
    %16 = vsyncpa %s15, 0
    loop: start=0, step=1, limit=6
    $region2: #{tpu_custom_call.1} parent=1 // loop_pre_header
      _
    $region3: #{tpu_custom_call.1} parent=1 // loop_header
      %s18 = sphi 0, %s22
      %p19 = scmp.ge.s32.totalorder %s18, 6
      %s28 = sphi 0, %s30
      %s31 = sphi 0, %s28
      %s32 = sphi 0, %s31
      %s48 = sphi 0, %s32
      %s52 = sphi 0, %s52
      %s54 = sphi 0, %s52
      %s55 = sphi 0, %s54
      %s69 = sphi 0, %s55
      %s73 = sphi 0, %s73
      %s75 = sphi 0, %s73
      %s76 = sphi 0, %s75
      %s90 = sphi 0, %s76
      %s94 = sphi 0, %s94
      %s96 = sphi 0, %s94
      %s97 = sphi 0, %s96
      %s111 = sphi 0, %s97
      %s117 = sphi 0, %s119
      %s120 = sphi 0, %s117
      %s121 = sphi 0, %s120
      %s137 = sphi 0, %s121
    $region4: #{tpu_custom_call.1} parent=1 // loop_header_branch
      %21 = sbr.rel (%p19) target = $region8
    $region5: #{tpu_custom_call.1} parent=1 // loop_body
      %s23 = ssub.s32 %s18, 1
      %s24 = ssub.s32 %s18, 2
      %s25 = sadd.s32 %s18, 1
      %s26 = ssub.s32 %s18, %s25
      %p27 = scmp.eq.s32.totalorder %s26, 0
      %s29 = sadd.s32 %s28, 1
      %s30 = scalar_select %p27, %s28, %s29
      %p33 = pneg %p27
      %p34 = scmp.eq.s32.totalorder %s18, 3
      %p35 = por %p33, %p34
      %p36 = scmp.ne.s32.totalorder %s28, %s31
      %p37 = scmp.eq.s32.totalorder %s18, 0
      %p38 = por %p36, %p37
      %p39 = scmp.ne.s32.totalorder %s28, %s31
      %p40 = scmp.eq.s32.totalorder %s23, 3
      %p41 = por %p39, %p40
      %p42 = scmp.ne.s32.totalorder %s31, %s32
      %p43 = scmp.eq.s32.totalorder %s23, 0
      %p44 = por %p42, %p43
      %p45 = scmp.ne.s32.totalorder %s31, %s32
      %p46 = scmp.eq.s32.totalorder %s24, 3
      %p47 = por %p45, %p46
      %p49 = scmp.ne.s32.totalorder %s32, %s48
      %p50 = scmp.eq.s32.totalorder %s24, 0
      %p51 = por %p49, %p50
      %s53 = sadd.s32 %s52, 1
      %p56 = scmp.eq.s32.totalorder %s18, 3
      %p57 = scmp.ne.s32.totalorder %s52, %s54
      %p58 = scmp.eq.s32.totalorder %s18, 0
      %p59 = por %p57, %p58
      %p60 = scmp.ne.s32.totalorder %s52, %s54
      %p61 = scmp.eq.s32.totalorder %s23, 3
      %p62 = por %p60, %p61
      %p63 = scmp.ne.s32.totalorder %s54, %s55
      %p64 = scmp.eq.s32.totalorder %s23, 0
      %p65 = por %p63, %p64
      %p66 = scmp.ne.s32.totalorder %s54, %s55
      %p67 = scmp.eq.s32.totalorder %s24, 3
      %p68 = por %p66, %p67
      %p70 = scmp.ne.s32.totalorder %s55, %s69
      %p71 = scmp.eq.s32.totalorder %s24, 0
      %p72 = por %p70, %p71
      %s74 = sadd.s32 %s73, 1
      %p77 = scmp.eq.s32.totalorder %s18, 3
      %p78 = scmp.ne.s32.totalorder %s73, %s75
      %p79 = scmp.eq.s32.totalorder %s18, 0
      %p80 = por %p78, %p79
      %p81 = scmp.ne.s32.totalorder %s73, %s75
      %p82 = scmp.eq.s32.totalorder %s23, 3
      %p83 = por %p81, %p82
      %p84 = scmp.ne.s32.totalorder %s75, %s76
      %p85 = scmp.eq.s32.totalorder %s23, 0
      %p86 = por %p84, %p85
      %p87 = scmp.ne.s32.totalorder %s75, %s76
      %p88 = scmp.eq.s32.totalorder %s24, 3
      %p89 = por %p87, %p88
      %p91 = scmp.ne.s32.totalorder %s76, %s90
      %p92 = scmp.eq.s32.totalorder %s24, 0
      %p93 = por %p91, %p92
      %s95 = sadd.s32 %s94, 1
      %p98 = scmp.eq.s32.totalorder %s18, 3
      %p99 = scmp.ne.s32.totalorder %s94, %s96
      %p100 = scmp.eq.s32.totalorder %s18, 0
      %p101 = por %p99, %p100
      %p102 = scmp.ne.s32.totalorder %s94, %s96
      %p103 = scmp.eq.s32.totalorder %s23, 3
      %p104 = por %p102, %p103
      %p105 = scmp.ne.s32.totalorder %s96, %s97
      %p106 = scmp.eq.s32.totalorder %s23, 0
      %p107 = por %p105, %p106
      %p108 = scmp.ne.s32.totalorder %s96, %s97
      %p109 = scmp.eq.s32.totalorder %s24, 3
      %p110 = por %p108, %p109
      %p112 = scmp.ne.s32.totalorder %s97, %s111
      %p113 = scmp.eq.s32.totalorder %s24, 0
      %p114 = por %p112, %p113
      %s115 = ssub.s32 %s18, %s25
      %p116 = scmp.eq.s32.totalorder %s115, 0
      %s118 = sadd.s32 %s117, 1
      %s119 = scalar_select %p116, %s117, %s118
      %p122 = pneg %p116
      %p123 = scmp.eq.s32.totalorder %s18, 3
      %p124 = por %p122, %p123
      %p125 = scmp.ne.s32.totalorder %s117, %s120
      %p126 = scmp.eq.s32.totalorder %s18, 0
      %p127 = por %p125, %p126
      %p128 = scmp.ne.s32.totalorder %s117, %s120
      %p129 = scmp.eq.s32.totalorder %s23, 3
      %p130 = por %p128, %p129
      %p131 = scmp.ne.s32.totalorder %s120, %s121
      %p132 = scmp.eq.s32.totalorder %s23, 0
      %p133 = por %p131, %p132
      %p134 = scmp.ne.s32.totalorder %s120, %s121
      %p135 = scmp.eq.s32.totalorder %s24, 3
      %p136 = por %p134, %p135
      %p138 = scmp.ne.s32.totalorder %s121, %s137
      %p139 = scmp.eq.s32.totalorder %s24, 0
      %p140 = por %p138, %p139
      %p141 = scmp.le.s32.totalorder 1, %s18
      %p142 = scmp.lt.s32.totalorder %s18, 5
      %p143 = pnand %p141, %p142
      %p144 = pneg %p143
      // Predicated region
      $region9: #{tpu_custom_call.1} parent=5 // pred_check
        _
      $region10: #{tpu_custom_call.1} parent=5 // pred_check_branch
        %146 = sbr.rel (%p143) target = $region12
      $region11: #{tpu_custom_call.1} parent=5 // pred_region
        %s147 = ssub.s32 %s18, 1
        // Predicated region
        $region13: #{tpu_custom_call.1} parent=11 // pred_check
          %p148 = pneg %p65
        $region14: #{tpu_custom_call.1} parent=11 // pred_check_branch
          %150 = sbr.rel (%p148) target = $region16
        $region15: #{tpu_custom_call.1} parent=11 // pred_region
          %s152 = ssub.s32 48, 48
          %153 = vsyncadd [#allocation6], %s152
          %s155 = sshll.u32 [#allocation5], 4
          %s156 = int_to_ptr.vmem [resolvable:$true] %s155
          %158 = dma.hbm_to_vmem [thread:$0]  %s1, 48, %s156, [#allocation6]
        $region16: #{tpu_custom_call.1} parent=11 // pred_fallthru
          _
        // Predicated region
        $region17: #{tpu_custom_call.1} parent=11 // pred_check
          %p159 = pneg %p86
        $region18: #{tpu_custom_call.1} parent=11 // pred_check_branch
          %161 = sbr.rel (%p159) target = $region20
        $region19: #{tpu_custom_call.1} parent=11 // pred_region
          %s163 = ssub.s32 3072, 3072
          %164 = vsyncadd [#allocation6], %s163
          %s165 = sshll.u32 [#allocation7], 4
          %s166 = int_to_ptr.vmem [resolvable:$true] %s165
          %171 = dma.hbm_to_vmem [thread:$0]  %s2, 3072, %s166, [#allocation6], 64, 64, 4
        $region20: #{tpu_custom_call.1} parent=11 // pred_fallthru
          _
        // Predicated region
        $region21: #{tpu_custom_call.1} parent=11 // pred_check
          %p172 = pneg %p107
        $region22: #{tpu_custom_call.1} parent=11 // pred_check_branch
          %174 = sbr.rel (%p172) target = $region24
        $region23: #{tpu_custom_call.1} parent=11 // pred_region
          %s176 = ssub.s32 3072, 3072
          %177 = vsyncadd [#allocation9], %s176
          %s178 = sshll.u32 [#allocation8], 4
          %s179 = int_to_ptr.vmem [resolvable:$true] %s178
          %184 = dma.hbm_to_vmem [thread:$0]  %s3, 3072, %s179, [#allocation9], 192, 192, 12
        $region24: #{tpu_custom_call.1} parent=11 // pred_fallthru
          _
      $region12: #{tpu_custom_call.1} parent=5 // pred_fallthru
        _
      %p185 = scmp.lt.s32.totalorder %s18, 4
      // Predicated region
      $region25: #{tpu_custom_call.1} parent=5 // pred_check
        %p186 = pneg %p185
      $region26: #{tpu_custom_call.1} parent=5 // pred_check_branch
        %188 = sbr.rel (%p186) target = $region28
      $region27: #{tpu_custom_call.1} parent=5 // pred_region
        // Predicated region
        $region29: #{tpu_custom_call.1} parent=27 // pred_check
          %p189 = pneg %p38
        $region30: #{tpu_custom_call.1} parent=27 // pred_check_branch
          %191 = sbr.rel (%p189) target = $region32
        $region31: #{tpu_custom_call.1} parent=27 // pred_region
          %s192 = sand.u32 %s28, 1
          %s193 = scalar_lea.sflag [#allocation3], %s192
          %s194 = sand.u32 %s28, 1
          %s195 = smul.addr %s194, 48
          %s196 = scalar_lea.vmem [#allocation2], %s195
          %s197 = smul.u32 2, %s18
          %s199 = ssub.s32 768, 768
          %200 = vsyncadd %s193, %s199
          %s201 = smul.addr %s197, 3
          %s202 = smul.addr %s201, 128
          %s203 = scalar_lea.hbm %s0, %s202
          %s204 = sshll.u32 %s196, 4
          %s205 = int_to_ptr.vmem [resolvable:$true] %s204
          %210 = dma.hbm_to_vmem [thread:$0]  %s203, 768, %s205, %s193, 384, 384, 24
        $region32: #{tpu_custom_call.1} parent=27 // pred_fallthru
          _
      $region28: #{tpu_custom_call.1} parent=5 // pred_fallthru
        _
      %p211 = scmp.le.s32.totalorder 1, %s18
      %p212 = scmp.lt.s32.totalorder %s18, 5
      %p213 = pnand %p211, %p212
      %p214 = pneg %p213
      // Predicated region
      $region33: #{tpu_custom_call.1} parent=5 // pred_check
        _
      $region34: #{tpu_custom_call.1} parent=5 // pred_check_branch
        %216 = sbr.rel (%p213) target = $region36
      $region35: #{tpu_custom_call.1} parent=5 // pred_region
        %s217 = ssub.s32 %s18, 1
        %s218 = sand.u32 %s31, 1
        %s219 = scalar_lea.sflag [#allocation3], %s218
        %s220 = sand.u32 %s31, 1
        %s221 = smul.addr %s220, 48
        %s222 = scalar_lea.vmem [#allocation2], %s221
        // Predicated region
        $region37: #{tpu_custom_call.1} parent=35 // pred_check
          %p223 = pneg %p44
        $region38: #{tpu_custom_call.1} parent=35 // pred_check_branch
          %225 = sbr.rel (%p223) target = $region40
        $region39: #{tpu_custom_call.1} parent=35 // pred_region
          %226 = dma.done %s219, 768
        $region40: #{tpu_custom_call.1} parent=35 // pred_fallthru
          _
        // Predicated region
        $region41: #{tpu_custom_call.1} parent=35 // pred_check
          %p227 = pneg %p65
        $region42: #{tpu_custom_call.1} parent=35 // pred_check_branch
          %229 = sbr.rel (%p227) target = $region44
        $region43: #{tpu_custom_call.1} parent=35 // pred_region
          %230 = dma.done [#allocation6], 48
        $region44: #{tpu_custom_call.1} parent=35 // pred_fallthru
          _
        // Predicated region
        $region45: #{tpu_custom_call.1} parent=35 // pred_check
          %p231 = pneg %p86
        $region46: #{tpu_custom_call.1} parent=35 // pred_check_branch
          %233 = sbr.rel (%p231) target = $region48
        $region47: #{tpu_custom_call.1} parent=35 // pred_region
          %234 = dma.done [#allocation6], 3072
        $region48: #{tpu_custom_call.1} parent=35 // pred_fallthru
          _
        // Predicated region
        $region49: #{tpu_custom_call.1} parent=35 // pred_check
          %p235 = pneg %p107
        $region50: #{tpu_custom_call.1} parent=35 // pred_check_branch
          %237 = sbr.rel (%p235) target = $region52
        $region51: #{tpu_custom_call.1} parent=35 // pred_region
          %238 = dma.done [#allocation9], 3072
        $region52: #{tpu_custom_call.1} parent=35 // pred_fallthru
          _
        %s239 = sand.u32 %s31, 1
        %s240 = scalar_lea.sflag [#allocation3], %s239
        %s241 = sand.u32 %s31, 1
        %s242 = smul.addr %s241, 48
        %s243 = scalar_lea.vmem [#allocation2], %s242
        %p244 = pneg %p44
        %p245 = pneg %p41
        %p246 = pneg %p65
        %p247 = pneg %p62
        %p248 = pneg %p86
        %p249 = pneg %p83
        %p250 = pneg %p107
        %p251 = pneg %p104
        %p252 = pneg %p133
        %p253 = pneg %p130
        %s254 = sand.u32 %s120, 1
        %s255 = scalar_lea.sflag [#allocation4], %s254
        %s256 = sand.u32 %s120, 1
        %s257 = smul.addr %s256, 48
        %s258 = scalar_lea.vmem [#allocation10], %s257
        %s259 = smul.u32 2, %s23
        %s260 = smul.u32 2, %s23
        %v262 = vld [vmem:[%s222] sm:$0xff]
        %v263 = vld [vmem:[%s222 + $0x8] sm:$0xff]
        %v264 = vld [vmem:[%s222 + $0x10] sm:$0xff]
        %v265 = vld [vmem:[%s222 + $0x18] sm:$0xff]
        %v266 = vld [vmem:[%s222 + $0x20] sm:$0xff]
        %v267 = vld [vmem:[%s222 + $0x28] sm:$0xff]
        %v268 = vld [vmem:[#allocation5] sm:$0x7]
        %v269 = vld [vmem:[#allocation7] sm:$0xf]
        %v270 = vld [vmem:[#allocation7 + $0x4] sm:$0xf]
        %v271 = vld [vmem:[#allocation7 + $0x8] sm:$0xf]
        %v272 = vld [vmem:[#allocation7 + $0xc] sm:$0xf]
        %v273 = vld [vmem:[#allocation7 + $0x10] sm:$0xf]
        %v274 = vld [vmem:[#allocation7 + $0x14] sm:$0xf]
        %v275 = vld [vmem:[#allocation7 + $0x18] sm:$0xf]
        %v276 = vld [vmem:[#allocation7 + $0x1c] sm:$0xf]
        %v277 = vld [vmem:[#allocation7 + $0x20] sm:$0xf]
        %v278 = vld [vmem:[#allocation7 + $0x24] sm:$0xf]
        %v279 = vld [vmem:[#allocation7 + $0x28] sm:$0xf]
        %v280 = vld [vmem:[#allocation7 + $0x2c] sm:$0xf]
        %v281 = vld [vmem:[#allocation7 + $0x30] sm:$0xf]
        %v282 = vld [vmem:[#allocation7 + $0x34] sm:$0xf]
        %v283 = vld [vmem:[#allocation7 + $0x38] sm:$0xf]
        %v284 = vld [vmem:[#allocation7 + $0x3c] sm:$0xf]
        %v285 = vld [vmem:[#allocation7 + $0x40] sm:$0xf]
        %v286 = vld [vmem:[#allocation7 + $0x44] sm:$0xf]
        %v287 = vld [vmem:[#allocation7 + $0x48] sm:$0xf]
        %v288 = vld [vmem:[#allocation7 + $0x4c] sm:$0xf]
        %v289 = vld [vmem:[#allocation7 + $0x50] sm:$0xf]
        %v290 = vld [vmem:[#allocation7 + $0x54] sm:$0xf]
        %v291 = vld [vmem:[#allocation7 + $0x58] sm:$0xf]
        %v292 = vld [vmem:[#allocation7 + $0x5c] sm:$0xf]
        %v293 = vld [vmem:[#allocation7 + $0x60] sm:$0xf]
        %v294 = vld [vmem:[#allocation7 + $0x64] sm:$0xf]
        %v295 = vld [vmem:[#allocation7 + $0x68] sm:$0xf]
        %v296 = vld [vmem:[#allocation7 + $0x6c] sm:$0xf]
        %v297 = vld [vmem:[#allocation7 + $0x70] sm:$0xf]
        %v298 = vld [vmem:[#allocation7 + $0x74] sm:$0xf]
        %v299 = vld [vmem:[#allocation7 + $0x78] sm:$0xf]
        %v300 = vld [vmem:[#allocation7 + $0x7c] sm:$0xf]
        %v301 = vld [vmem:[#allocation7 + $0x80] sm:$0xf]
        %v302 = vld [vmem:[#allocation7 + $0x84] sm:$0xf]
        %v303 = vld [vmem:[#allocation7 + $0x88] sm:$0xf]
        %v304 = vld [vmem:[#allocation7 + $0x8c] sm:$0xf]
        %v305 = vld [vmem:[#allocation7 + $0x90] sm:$0xf]
        %v306 = vld [vmem:[#allocation7 + $0x94] sm:$0xf]
        %v307 = vld [vmem:[#allocation7 + $0x98] sm:$0xf]
        %v308 = vld [vmem:[#allocation7 + $0x9c] sm:$0xf]
        %v309 = vld [vmem:[#allocation7 + $0xa0] sm:$0xf]
        %v310 = vld [vmem:[#allocation7 + $0xa4] sm:$0xf]
        %v311 = vld [vmem:[#allocation7 + $0xa8] sm:$0xf]
        %v312 = vld [vmem:[#allocation7 + $0xac] sm:$0xf]
        %v313 = vld [vmem:[#allocation7 + $0xb0] sm:$0xf]
        %v314 = vld [vmem:[#allocation7 + $0xb4] sm:$0xf]
        %v315 = vld [vmem:[#allocation7 + $0xb8] sm:$0xf]
        %v316 = vld [vmem:[#allocation7 + $0xbc] sm:$0xf]
        %v317 = vld [vmem:[#allocation8] sm:$0xff]
        %v318 = vld [vmem:[#allocation8 + $0x8] sm:$0xf]
        %v319 = vld [vmem:[#allocation8 + $0xc] sm:$0xff]
        %v320 = vld [vmem:[#allocation8 + $0x14] sm:$0xf]
        %v321 = vld [vmem:[#allocation8 + $0x18] sm:$0xff]
        %v322 = vld [vmem:[#allocation8 + $0x20] sm:$0xf]
        %v323 = vld [vmem:[#allocation8 + $0x24] sm:$0xff]
        %v324 = vld [vmem:[#allocation8 + $0x2c] sm:$0xf]
        %v325 = vld [vmem:[#allocation8 + $0x30] sm:$0xff]
        %v326 = vld [vmem:[#allocation8 + $0x38] sm:$0xf]
        %v327 = vld [vmem:[#allocation8 + $0x3c] sm:$0xff]
        %v328 = vld [vmem:[#allocation8 + $0x44] sm:$0xf]
        %v329 = vld [vmem:[#allocation8 + $0x48] sm:$0xff]
        %v330 = vld [vmem:[#allocation8 + $0x50] sm:$0xf]
        %v331 = vld [vmem:[#allocation8 + $0x54] sm:$0xff]
        %v332 = vld [vmem:[#allocation8 + $0x5c] sm:$0xf]
        %v333 = vld [vmem:[#allocation8 + $0x60] sm:$0xff]
        %v334 = vld [vmem:[#allocation8 + $0x68] sm:$0xf]
        %v335 = vld [vmem:[#allocation8 + $0x6c] sm:$0xff]
        %v336 = vld [vmem:[#allocation8 + $0x74] sm:$0xf]
        %v337 = vld [vmem:[#allocation8 + $0x78] sm:$0xff]
        %v338 = vld [vmem:[#allocation8 + $0x80] sm:$0xf]
        %v339 = vld [vmem:[#allocation8 + $0x84] sm:$0xff]
        %v340 = vld [vmem:[#allocation8 + $0x8c] sm:$0xf]
        %v341 = vld [vmem:[#allocation8 + $0x90] sm:$0xff]
        %v342 = vld [vmem:[#allocation8 + $0x98] sm:$0xf]
        %v343 = vld [vmem:[#allocation8 + $0x9c] sm:$0xff]
        %v344 = vld [vmem:[#allocation8 + $0xa4] sm:$0xf]
        %v345 = vld [vmem:[#allocation8 + $0xa8] sm:$0xff]
        %v346 = vld [vmem:[#allocation8 + $0xb0] sm:$0xf]
        %v347 = vld [vmem:[#allocation8 + $0xb4] sm:$0xff]
        %v348 = vld [vmem:[#allocation8 + $0xbc] sm:$0xf]
        %v349 = vpack.c.bf16 %v265, %v262
        %v350 = vpack.c.bf16 %v266, %v263
        %v351 = vpack.c.bf16 %v267, %v264
        %v352 = vunpack.c.l.bf16 %v349
        %v353 = vunpack.c.l.bf16 %v350
        %v354 = vunpack.c.l.bf16 %v351
        %v355 = vunpack.c.h.bf16 %v349
        %v356 = vunpack.c.h.bf16 %v350
        %v357 = vunpack.c.h.bf16 %v351
        %v358 = vsub.f32 %v262, %v352
        %v359 = vsub.f32 %v263, %v353
        %v360 = vsub.f32 %v264, %v354
        %v361 = vsub.f32 %v265, %v355
        %v362 = vsub.f32 %v266, %v356
        %v363 = vsub.f32 %v267, %v357
        %v364 = vpack.c.bf16 %v361, %v358
        %v365 = vpack.c.bf16 %v362, %v359
        %v366 = vpack.c.bf16 %v363, %v360
        %v415 = vunpack.c.l.b16 %v269
        %v416 = vunpack.c.l.b16 %v270
        %v417 = vunpack.c.l.b16 %v271
        %v418 = vunpack.c.l.b16 %v272
        %v419 = vunpack.c.l.b16 %v273
        %v420 = vunpack.c.l.b16 %v274
        %v421 = vunpack.c.l.b16 %v275
        %v422 = vunpack.c.l.b16 %v276
        %v423 = vunpack.c.l.b16 %v277
        %v424 = vunpack.c.l.b16 %v278
        %v425 = vunpack.c.l.b16 %v279
        %v426 = vunpack.c.l.b16 %v280
        %v427 = vunpack.c.l.b16 %v281
        %v428 = vunpack.c.l.b16 %v282
        %v429 = vunpack.c.l.b16 %v283
        %v430 = vunpack.c.l.b16 %v284
        %v431 = vunpack.c.l.b16 %v285
        %v432 = vunpack.c.l.b16 %v286
        %v433 = vunpack.c.l.b16 %v287
        %v434 = vunpack.c.l.b16 %v288
        %v435 = vunpack.c.l.b16 %v289
        %v436 = vunpack.c.l.b16 %v290
        %v437 = vunpack.c.l.b16 %v291
        %v438 = vunpack.c.l.b16 %v292
        %v439 = vunpack.c.l.b16 %v293
        %v440 = vunpack.c.l.b16 %v294
        %v441 = vunpack.c.l.b16 %v295
        %v442 = vunpack.c.l.b16 %v296
        %v443 = vunpack.c.l.b16 %v297
        %v444 = vunpack.c.l.b16 %v298
        %v445 = vunpack.c.l.b16 %v299
        %v446 = vunpack.c.l.b16 %v300
        %v447 = vunpack.c.l.b16 %v301
        %v448 = vunpack.c.l.b16 %v302
        %v449 = vunpack.c.l.b16 %v303
        %v450 = vunpack.c.l.b16 %v304
        %v451 = vunpack.c.l.b16 %v305
        %v452 = vunpack.c.l.b16 %v306
        %v453 = vunpack.c.l.b16 %v307
        %v454 = vunpack.c.l.b16 %v308
        %v455 = vunpack.c.l.b16 %v309
        %v456 = vunpack.c.l.b16 %v310
        %v457 = vunpack.c.l.b16 %v311
        %v458 = vunpack.c.l.b16 %v312
        %v459 = vunpack.c.l.b16 %v313
        %v460 = vunpack.c.l.b16 %v314
        %v461 = vunpack.c.l.b16 %v315
        %v462 = vunpack.c.l.b16 %v316
        %v463 = vpack.c.b16 %v416, %v415
        %v464 = vpack.c.b16 %v418, %v417
        %v465 = vpack.c.b16 %v420, %v419
        %v466 = vpack.c.b16 %v422, %v421
        %v467 = vpack.c.b16 %v424, %v423
        %v468 = vpack.c.b16 %v426, %v425
        %v469 = vpack.c.b16 %v428, %v427
        %v470 = vpack.c.b16 %v430, %v429
        %v471 = vpack.c.b16 %v432, %v431
        %v472 = vpack.c.b16 %v434, %v433
        %v473 = vpack.c.b16 %v436, %v435
        %v474 = vpack.c.b16 %v438, %v437
        %v475 = vpack.c.b16 %v440, %v439
        %v476 = vpack.c.b16 %v442, %v441
        %v477 = vpack.c.b16 %v444, %v443
        %v478 = vpack.c.b16 %v446, %v445
        %v479 = vpack.c.b16 %v448, %v447
        %v480 = vpack.c.b16 %v450, %v449
        %v481 = vpack.c.b16 %v452, %v451
        %v482 = vpack.c.b16 %v454, %v453
        %v483 = vpack.c.b16 %v456, %v455
        %v484 = vpack.c.b16 %v458, %v457
        %v485 = vpack.c.b16 %v460, %v459
        %v486 = vpack.c.b16 %v462, %v461
        %511 = vmatprep.subr.bf16.mxu0 0
        %512 = vmatpush1.bf16.msra.mxu0 %v470
        %513 = vmatprep.subr.bf16.mxu0 0
        %514 = vmatpush1.bf16.msra.mxu0 %v469
        %515 = vmatprep.subr.bf16.mxu0 0
        %516 = vmatpush1.bf16.msra.mxu0 %v468
        %517 = vmatprep.subr.bf16.mxu0 0
        %518 = vmatpush1.bf16.msra.mxu0 %v467
        %519 = vmatprep.subr.bf16.mxu0 0
        %520 = vmatpush1.bf16.msra.mxu0 %v466
        %521 = vmatprep.subr.bf16.mxu0 0
        %522 = vmatpush1.bf16.msra.mxu0 %v465
        %523 = vmatprep.subr.bf16.mxu0 0
        %524 = vmatpush1.bf16.msra.mxu0 %v464
        %525 = vmatprep.subr.bf16.mxu0 0
        %526 = vmatpush1.bf16.msra.mxu0 %v463
        %527 = vmatprep.subr.bf16.mxu0 0
        %528 = vmatpush2.bf16.msra.mxu0 %v478
        %529 = vmatprep.subr.bf16.mxu0 0
        %530 = vmatpush2.bf16.msra.mxu0 %v477
        %531 = vmatprep.subr.bf16.mxu0 0
        %532 = vmatpush2.bf16.msra.mxu0 %v476
        %533 = vmatprep.subr.bf16.mxu0 0
        %534 = vmatpush2.bf16.msra.mxu0 %v475
        %535 = vmatprep.subr.bf16.mxu0 0
        %536 = vmatpush2.bf16.msra.mxu0 %v474
        %537 = vmatprep.subr.bf16.mxu0 0
        %538 = vmatpush2.bf16.msra.mxu0 %v473
        %539 = vmatprep.subr.bf16.mxu0 0
        %540 = vmatpush2.bf16.msra.mxu0 %v472
        %541 = vmatprep.subr.bf16.mxu0 0
        %542 = vmatpush2.bf16.msra.mxu0 %v471
        %543 = vmatprep.mubr.bf16.mxu0 %v365
        %544 = vmatmul.mubr.bf16.gmra.mxu0 %v364
        %v545 = vpop.f32.mrf.mxu0
        %v546 = vadd.f32 0.0, %v545
        %v547 = vpop.f32.mrf.mxu0
        %v548 = vpop.f32.mrf.mxu0
        %v549 = vadd.f32 0.0, %v548
        %v550 = vpop.f32.mrf.mxu0
        %551 = vdwg.mxu0
        %552 = vmatprep.subr.bf16.mxu0 0
        %553 = vmatpush1.bf16.msra.mxu0 %v486
        %554 = vmatprep.subr.bf16.mxu0 0
        %555 = vmatpush1.bf16.msra.mxu0 %v485
        %556 = vmatprep.subr.bf16.mxu0 0
        %557 = vmatpush1.bf16.msra.mxu0 %v484
        %558 = vmatprep.subr.bf16.mxu0 0
        %559 = vmatpush1.bf16.msra.mxu0 %v483
        %560 = vmatprep.subr.bf16.mxu0 0
        %561 = vmatpush1.bf16.msra.mxu0 %v482
        %562 = vmatprep.subr.bf16.mxu0 0
        %563 = vmatpush1.bf16.msra.mxu0 %v481
        %564 = vmatprep.subr.bf16.mxu0 0
        %565 = vmatpush1.bf16.msra.mxu0 %v480
        %566 = vmatprep.subr.bf16.mxu0 0
        %567 = vmatpush1.bf16.msra.mxu0 %v479
        %568 = vmatprep.subr.bf16.mxu0 0
        %569 = vmatpush2.bf16.msra.mxu0 0
        %570 = vmatprep.subr.bf16.mxu0 0
        %571 = vmatpush2.bf16.msra.mxu0 0
        %572 = vmatprep.subr.bf16.mxu0 0
        %573 = vmatpush2.bf16.msra.mxu0 0
        %574 = vmatprep.subr.bf16.mxu0 0
        %575 = vmatpush2.bf16.msra.mxu0 0
        %576 = vmatprep.subr.bf16.mxu0 0
        %577 = vmatpush2.bf16.msra.mxu0 0
        %578 = vmatprep.subr.bf16.mxu0 0
        %579 = vmatpush2.bf16.msra.mxu0 0
        %580 = vmatprep.subr.bf16.mxu0 0
        %581 = vmatpush2.bf16.msra.mxu0 0
        %582 = vmatprep.subr.bf16.mxu0 0
        %583 = vmatpush2.bf16.msra.mxu0 0
        %584 = vmatprep.mubr.bf16.mxu0 0
        %585 = vmatmul.mubr.bf16.gmra.mxu0 %v366
        %v586 = vpop.f32.mrf.mxu0
        %v587 = vadd.f32 %v546, %v586
        %v588 = vpop.f32.mrf.mxu0
        %v589 = vpop.f32.mrf.mxu0
        %v590 = vadd.f32 %v549, %v589
        %v591 = vpop.f32.mrf.mxu0
        %592 = vdwg.mxu0
        %593 = vmatprep.subr.bf16.mxu0 0
        %594 = vmatpush1.bf16.msra.mxu0 %v470
        %595 = vmatprep.subr.bf16.mxu0 0
        %596 = vmatpush1.bf16.msra.mxu0 %v469
        %597 = vmatprep.subr.bf16.mxu0 0
        %598 = vmatpush1.bf16.msra.mxu0 %v468
        %599 = vmatprep.subr.bf16.mxu0 0
        %600 = vmatpush1.bf16.msra.mxu0 %v467
        %601 = vmatprep.subr.bf16.mxu0 0
        %602 = vmatpush1.bf16.msra.mxu0 %v466
        %603 = vmatprep.subr.bf16.mxu0 0
        %604 = vmatpush1.bf16.msra.mxu0 %v465
        %605 = vmatprep.subr.bf16.mxu0 0
        %606 = vmatpush1.bf16.msra.mxu0 %v464
        %607 = vmatprep.subr.bf16.mxu0 0
        %608 = vmatpush1.bf16.msra.mxu0 %v463
        %609 = vmatprep.subr.bf16.mxu0 0
        %610 = vmatpush2.bf16.msra.mxu0 %v478
        %611 = vmatprep.subr.bf16.mxu0 0
        %612 = vmatpush2.bf16.msra.mxu0 %v477
        %613 = vmatprep.subr.bf16.mxu0 0
        %614 = vmatpush2.bf16.msra.mxu0 %v476
        %615 = vmatprep.subr.bf16.mxu0 0
        %616 = vmatpush2.bf16.msra.mxu0 %v475
        %617 = vmatprep.subr.bf16.mxu0 0
        %618 = vmatpush2.bf16.msra.mxu0 %v474
        %619 = vmatprep.subr.bf16.mxu0 0
        %620 = vmatpush2.bf16.msra.mxu0 %v473
        %621 = vmatprep.subr.bf16.mxu0 0
        %622 = vmatpush2.bf16.msra.mxu0 %v472
        %623 = vmatprep.subr.bf16.mxu0 0
        %624 = vmatpush2.bf16.msra.mxu0 %v471
        %625 = vmatprep.mubr.bf16.mxu0 %v350
        %626 = vmatmul.mubr.bf16.gmra.mxu0 %v349
        %v627 = vpop.f32.mrf.mxu0
        %v628 = vadd.f32 %v587, %v627
        %v629 = vpop.f32.mrf.mxu0
        %v630 = vpop.f32.mrf.mxu0
        %v631 = vadd.f32 %v590, %v630
        %v632 = vpop.f32.mrf.mxu0
        %633 = vdwg.mxu0
        %634 = vmatprep.subr.bf16.mxu0 0
        %635 = vmatpush1.bf16.msra.mxu0 %v486
        %636 = vmatprep.subr.bf16.mxu0 0
        %637 = vmatpush1.bf16.msra.mxu0 %v485
        %638 = vmatprep.subr.bf16.mxu0 0
        %639 = vmatpush1.bf16.msra.mxu0 %v484
        %640 = vmatprep.subr.bf16.mxu0 0
        %641 = vmatpush1.bf16.msra.mxu0 %v483
        %642 = vmatprep.subr.bf16.mxu0 0
        %643 = vmatpush1.bf16.msra.mxu0 %v482
        %644 = vmatprep.subr.bf16.mxu0 0
        %645 = vmatpush1.bf16.msra.mxu0 %v481
        %646 = vmatprep.subr.bf16.mxu0 0
        %647 = vmatpush1.bf16.msra.mxu0 %v480
        %648 = vmatprep.subr.bf16.mxu0 0
        %649 = vmatpush1.bf16.msra.mxu0 %v479
        %650 = vmatprep.subr.bf16.mxu0 0
        %651 = vmatpush2.bf16.msra.mxu0 0
        %652 = vmatprep.subr.bf16.mxu0 0
        %653 = vmatpush2.bf16.msra.mxu0 0
        %654 = vmatprep.subr.bf16.mxu0 0
        %655 = vmatpush2.bf16.msra.mxu0 0
        %656 = vmatprep.subr.bf16.mxu0 0
        %657 = vmatpush2.bf16.msra.mxu0 0
        %658 = vmatprep.subr.bf16.mxu0 0
        %659 = vmatpush2.bf16.msra.mxu0 0
        %660 = vmatprep.subr.bf16.mxu0 0
        %661 = vmatpush2.bf16.msra.mxu0 0
        %662 = vmatprep.subr.bf16.mxu0 0
        %663 = vmatpush2.bf16.msra.mxu0 0
        %664 = vmatprep.subr.bf16.mxu0 0
        %665 = vmatpush2.bf16.msra.mxu0 0
        %666 = vmatprep.mubr.bf16.mxu0 0
        %667 = vmatmul.mubr.bf16.gmra.mxu0 %v351
        %v668 = vpop.f32.mrf.mxu0
        %v669 = vadd.f32 %v628, %v668
        %v670 = vpop.f32.mrf.mxu0
        %v671 = vpop.f32.mrf.mxu0
        %v672 = vadd.f32 %v631, %v671
        %v673 = vpop.f32.mrf.mxu0
        %674 = vdwg.mxu0
        %v675 = vmul.f32 %v669, 0.020833334
        %v676 = vmul.f32 %v672, 0.020833334
        %v677 = vpack.c.bf16 %v676, %v675
        %v678 = vunpack.c.l.bf16 %v677
        %v679 = vunpack.c.h.bf16 %v677
        %v680 = vsub.f32 %v675, %v678
        %v681 = vsub.f32 %v676, %v679
        %v682 = vpack.c.bf16 %v681, %v680
        %v715 = vunpack.c.l.b16 %v317
        %v716 = vunpack.c.h.b16 %v317
        %v717 = vunpack.c.l.b16 %v318
        %v718 = vunpack.c.l.b16 %v319
        %v719 = vunpack.c.h.b16 %v319
        %v720 = vunpack.c.l.b16 %v320
        %v721 = vunpack.c.l.b16 %v321
        %v722 = vunpack.c.h.b16 %v321
        %v723 = vunpack.c.l.b16 %v322
        %v724 = vunpack.c.l.b16 %v323
        %v725 = vunpack.c.h.b16 %v323
        %v726 = vunpack.c.l.b16 %v324
        %v727 = vunpack.c.l.b16 %v325
        %v728 = vunpack.c.h.b16 %v325
        %v729 = vunpack.c.l.b16 %v326
        %v730 = vunpack.c.l.b16 %v327
        %v731 = vunpack.c.h.b16 %v327
        %v732 = vunpack.c.l.b16 %v328
        %v733 = vunpack.c.l.b16 %v329
        %v734 = vunpack.c.h.b16 %v329
        %v735 = vunpack.c.l.b16 %v330
        %v736 = vunpack.c.l.b16 %v331
        %v737 = vunpack.c.h.b16 %v331
        %v738 = vunpack.c.l.b16 %v332
        %v739 = vunpack.c.l.b16 %v333
        %v740 = vunpack.c.h.b16 %v333
        %v741 = vunpack.c.l.b16 %v334
        %v742 = vunpack.c.l.b16 %v335
        %v743 = vunpack.c.h.b16 %v335
        %v744 = vunpack.c.l.b16 %v336
        %v745 = vunpack.c.l.b16 %v337
        %v746 = vunpack.c.h.b16 %v337
        %v747 = vunpack.c.l.b16 %v338
        %v748 = vunpack.c.l.b16 %v339
        %v749 = vunpack.c.h.b16 %v339
        %v750 = vunpack.c.l.b16 %v340
        %v751 = vunpack.c.l.b16 %v341
        %v752 = vunpack.c.h.b16 %v341
        %v753 = vunpack.c.l.b16 %v342
        %v754 = vunpack.c.l.b16 %v343
        %v755 = vunpack.c.h.b16 %v343
        %v756 = vunpack.c.l.b16 %v344
        %v757 = vunpack.c.l.b16 %v345
        %v758 = vunpack.c.h.b16 %v345
        %v759 = vunpack.c.l.b16 %v346
        %v760 = vunpack.c.l.b16 %v347
        %v761 = vunpack.c.h.b16 %v347
        %v762 = vunpack.c.l.b16 %v348
        %v763 = vpack.c.b16 %v718, %v715
        %v764 = vpack.c.b16 %v719, %v716
        %v765 = vpack.c.b16 %v720, %v717
        %v766 = vpack.c.b16 %v724, %v721
        %v767 = vpack.c.b16 %v725, %v722
        %v768 = vpack.c.b16 %v726, %v723
        %v769 = vpack.c.b16 %v730, %v727
        %v770 = vpack.c.b16 %v731, %v728
        %v771 = vpack.c.b16 %v732, %v729
        %v772 = vpack.c.b16 %v736, %v733
        %v773 = vpack.c.b16 %v737, %v734
        %v774 = vpack.c.b16 %v738, %v735
        %v775 = vpack.c.b16 %v742, %v739
        %v776 = vpack.c.b16 %v743, %v740
        %v777 = vpack.c.b16 %v744, %v741
        %v778 = vpack.c.b16 %v748, %v745
        %v779 = vpack.c.b16 %v749, %v746
        %v780 = vpack.c.b16 %v750, %v747
        %v781 = vpack.c.b16 %v754, %v751
        %v782 = vpack.c.b16 %v755, %v752
        %v783 = vpack.c.b16 %v756, %v753
        %v784 = vpack.c.b16 %v760, %v757
        %v785 = vpack.c.b16 %v761, %v758
        %v786 = vpack.c.b16 %v762, %v759
        %811 = vmatprep.subr.bf16.mxu0 %v785
        %812 = vmatpush1.bf16.msra.mxu0 %v784
        %813 = vmatprep.subr.bf16.mxu0 %v782
        %814 = vmatpush1.bf16.msra.mxu0 %v781
        %815 = vmatprep.subr.bf16.mxu0 %v779
        %816 = vmatpush1.bf16.msra.mxu0 %v778
        %817 = vmatprep.subr.bf16.mxu0 %v776
        %818 = vmatpush1.bf16.msra.mxu0 %v775
        %819 = vmatprep.subr.bf16.mxu0 %v773
        %820 = vmatpush1.bf16.msra.mxu0 %v772
        %821 = vmatprep.subr.bf16.mxu0 %v770
        %822 = vmatpush1.bf16.msra.mxu0 %v769
        %823 = vmatprep.subr.bf16.mxu0 %v767
        %824 = vmatpush1.bf16.msra.mxu0 %v766
        %825 = vmatprep.subr.bf16.mxu0 %v764
        %826 = vmatpush1.bf16.msra.mxu0 %v763
        %827 = vmatprep.subr.bf16.mxu0 0
        %828 = vmatpush2.bf16.msra.mxu0 0
        %829 = vmatprep.subr.bf16.mxu0 0
        %830 = vmatpush2.bf16.msra.mxu0 0
        %831 = vmatprep.subr.bf16.mxu0 0
        %832 = vmatpush2.bf16.msra.mxu0 0
        %833 = vmatprep.subr.bf16.mxu0 0
        %834 = vmatpush2.bf16.msra.mxu0 0
        %835 = vmatprep.subr.bf16.mxu0 0
        %836 = vmatpush2.bf16.msra.mxu0 0
        %837 = vmatprep.subr.bf16.mxu0 0
        %838 = vmatpush2.bf16.msra.mxu0 0
        %839 = vmatprep.subr.bf16.mxu0 0
        %840 = vmatpush2.bf16.msra.mxu0 0
        %841 = vmatprep.subr.bf16.mxu0 0
        %842 = vmatpush2.bf16.msra.mxu0 0
        %843 = vmatprep.mubr.bf16.mxu0 0
        %844 = vmatmul.mubr.bf16.gmra.mxu0 %v682
        %v845 = vpop.f32.mrf.mxu0
        %v846 = vadd.f32 0.0, %v845
        %v847 = vpop.f32.mrf.mxu0
        %v848 = vadd.f32 0.0, %v847
        %v849 = vpop.f32.mrf.mxu0
        %v850 = vadd.f32 0.0, %v849
        %v851 = vpop.f32.mrf.mxu0
        %v852 = vadd.f32 0.0, %v851
        %853 = vdwg.mxu0
        %854 = vmatprep.subr.bf16.mxu0 0
        %855 = vmatpush1.bf16.msra.mxu0 %v786
        %856 = vmatprep.subr.bf16.mxu0 0
        %857 = vmatpush1.bf16.msra.mxu0 %v783
        %858 = vmatprep.subr.bf16.mxu0 0
        %859 = vmatpush1.bf16.msra.mxu0 %v780
        %860 = vmatprep.subr.bf16.mxu0 0
        %861 = vmatpush1.bf16.msra.mxu0 %v777
        %862 = vmatprep.subr.bf16.mxu0 0
        %863 = vmatpush1.bf16.msra.mxu0 %v774
        %864 = vmatprep.subr.bf16.mxu0 0
        %865 = vmatpush1.bf16.msra.mxu0 %v771
        %866 = vmatprep.subr.bf16.mxu0 0
        %867 = vmatpush1.bf16.msra.mxu0 %v768
        %868 = vmatprep.subr.bf16.mxu0 0
        %869 = vmatpush1.bf16.msra.mxu0 %v765
        %870 = vmatprep.subr.bf16.mxu0 0
        %871 = vmatpush2.bf16.msra.mxu0 0
        %872 = vmatprep.subr.bf16.mxu0 0
        %873 = vmatpush2.bf16.msra.mxu0 0
        %874 = vmatprep.subr.bf16.mxu0 0
        %875 = vmatpush2.bf16.msra.mxu0 0
        %876 = vmatprep.subr.bf16.mxu0 0
        %877 = vmatpush2.bf16.msra.mxu0 0
        %878 = vmatprep.subr.bf16.mxu0 0
        %879 = vmatpush2.bf16.msra.mxu0 0
        %880 = vmatprep.subr.bf16.mxu0 0
        %881 = vmatpush2.bf16.msra.mxu0 0
        %882 = vmatprep.subr.bf16.mxu0 0
        %883 = vmatpush2.bf16.msra.mxu0 0
        %884 = vmatprep.subr.bf16.mxu0 0
        %885 = vmatpush2.bf16.msra.mxu0 0
        %886 = vmatprep.mubr.bf16.mxu0 0
        %887 = vmatmul.mubr.bf16.gmra.mxu0 %v682
        %v888 = vpop.f32.mrf.mxu0
        %v889 = vadd.f32 0.0, %v888
        %v890 = vpop.f32.mrf.mxu0
        %v891 = vpop.f32.mrf.mxu0
        %v892 = vadd.f32 0.0, %v891
        %v893 = vpop.f32.mrf.mxu0
        %894 = vdwg.mxu0
        %895 = vmatprep.subr.bf16.mxu0 %v785
        %896 = vmatpush1.bf16.msra.mxu0 %v784
        %897 = vmatprep.subr.bf16.mxu0 %v782
        %898 = vmatpush1.bf16.msra.mxu0 %v781
        %899 = vmatprep.subr.bf16.mxu0 %v779
        %900 = vmatpush1.bf16.msra.mxu0 %v778
        %901 = vmatprep.subr.bf16.mxu0 %v776
        %902 = vmatpush1.bf16.msra.mxu0 %v775
        %903 = vmatprep.subr.bf16.mxu0 %v773
        %904 = vmatpush1.bf16.msra.mxu0 %v772
        %905 = vmatprep.subr.bf16.mxu0 %v770
        %906 = vmatpush1.bf16.msra.mxu0 %v769
        %907 = vmatprep.subr.bf16.mxu0 %v767
        %908 = vmatpush1.bf16.msra.mxu0 %v766
        %909 = vmatprep.subr.bf16.mxu0 %v764
        %910 = vmatpush1.bf16.msra.mxu0 %v763
        %911 = vmatprep.subr.bf16.mxu0 0
        %912 = vmatpush2.bf16.msra.mxu0 0
        %913 = vmatprep.subr.bf16.mxu0 0
        %914 = vmatpush2.bf16.msra.mxu0 0
        %915 = vmatprep.subr.bf16.mxu0 0
        %916 = vmatpush2.bf16.msra.mxu0 0
        %917 = vmatprep.subr.bf16.mxu0 0
        %918 = vmatpush2.bf16.msra.mxu0 0
        %919 = vmatprep.subr.bf16.mxu0 0
        %920 = vmatpush2.bf16.msra.mxu0 0
        %921 = vmatprep.subr.bf16.mxu0 0
        %922 = vmatpush2.bf16.msra.mxu0 0
        %923 = vmatprep.subr.bf16.mxu0 0
        %924 = vmatpush2.bf16.msra.mxu0 0
        %925 = vmatprep.subr.bf16.mxu0 0
        %926 = vmatpush2.bf16.msra.mxu0 0
        %927 = vmatprep.mubr.bf16.mxu0 0
        %928 = vmatmul.mubr.bf16.gmra.mxu0 %v677
        %v929 = vpop.f32.mrf.mxu0
        %v930 = vadd.f32 %v846, %v929
        %v931 = vpop.f32.mrf.mxu0
        %v932 = vadd.f32 %v848, %v931
        %v933 = vpop.f32.mrf.mxu0
        %v934 = vadd.f32 %v850, %v933
        %v935 = vpop.f32.mrf.mxu0
        %v936 = vadd.f32 %v852, %v935
        %937 = vdwg.mxu0
        %938 = vmatprep.subr.bf16.mxu0 0
        %939 = vmatpush1.bf16.msra.mxu0 %v786
        %940 = vmatprep.subr.bf16.mxu0 0
        %941 = vmatpush1.bf16.msra.mxu0 %v783
        %942 = vmatprep.subr.bf16.mxu0 0
        %943 = vmatpush1.bf16.msra.mxu0 %v780
        %944 = vmatprep.subr.bf16.mxu0 0
        %945 = vmatpush1.bf16.msra.mxu0 %v777
        %946 = vmatprep.subr.bf16.mxu0 0
        %947 = vmatpush1.bf16.msra.mxu0 %v774
        %948 = vmatprep.subr.bf16.mxu0 0
        %949 = vmatpush1.bf16.msra.mxu0 %v771
        %950 = vmatprep.subr.bf16.mxu0 0
        %951 = vmatpush1.bf16.msra.mxu0 %v768
        %952 = vmatprep.subr.bf16.mxu0 0
        %953 = vmatpush1.bf16.msra.mxu0 %v765
        %954 = vmatprep.subr.bf16.mxu0 0
        %955 = vmatpush2.bf16.msra.mxu0 0
        %956 = vmatprep.subr.bf16.mxu0 0
        %957 = vmatpush2.bf16.msra.mxu0 0
        %958 = vmatprep.subr.bf16.mxu0 0
        %959 = vmatpush2.bf16.msra.mxu0 0
        %960 = vmatprep.subr.bf16.mxu0 0
        %961 = vmatpush2.bf16.msra.mxu0 0
        %962 = vmatprep.subr.bf16.mxu0 0
        %963 = vmatpush2.bf16.msra.mxu0 0
        %964 = vmatprep.subr.bf16.mxu0 0
        %965 = vmatpush2.bf16.msra.mxu0 0
        %966 = vmatprep.subr.bf16.mxu0 0
        %967 = vmatpush2.bf16.msra.mxu0 0
        %968 = vmatprep.subr.bf16.mxu0 0
        %969 = vmatpush2.bf16.msra.mxu0 0
        %970 = vmatprep.mubr.bf16.mxu0 0
        %971 = vmatmul.mubr.bf16.gmra.mxu0 %v677
        %v972 = vpop.f32.mrf.mxu0
        %v973 = vadd.f32 %v889, %v972
        %v974 = vpop.f32.mrf.mxu0
        %v975 = vpop.f32.mrf.mxu0
        %v976 = vadd.f32 %v892, %v975
        %v977 = vpop.f32.mrf.mxu0
        %978 = vdwg.mxu0
        %v979 = vsub.f32 %v262, %v930
        %v980 = vsub.f32 %v263, %v932
        %v981 = vsub.f32 %v264, %v973
        %v982 = vsub.f32 %v265, %v934
        %v983 = vsub.f32 %v266, %v936
        %v984 = vsub.f32 %v267, %v976
        %v985 = vmul.f32 %v979, %v979
        %v986 = vmul.f32 %v980, %v980
        %v987 = vmul.f32 %v981, %v981
        %v988 = vmul.f32 %v982, %v982
        %v989 = vmul.f32 %v983, %v983
        %v990 = vmul.f32 %v984, %v984
        %v991 = vpack.c.bf16 %v988, %v985
        %v992 = vpack.c.bf16 %v989, %v986
        %v993 = vpack.c.bf16 %v990, %v987
        %v994 = vunpack.c.l.bf16 %v991
        %v995 = vunpack.c.l.bf16 %v992
        %v996 = vunpack.c.l.bf16 %v993
        %v997 = vunpack.c.h.bf16 %v991
        %v998 = vunpack.c.h.bf16 %v992
        %v999 = vunpack.c.h.bf16 %v993
        %v1000 = vsub.f32 %v985, %v994
        %v1001 = vsub.f32 %v986, %v995
        %v1002 = vsub.f32 %v987, %v996
        %v1003 = vsub.f32 %v988, %v997
        %v1004 = vsub.f32 %v989, %v998
        %v1005 = vsub.f32 %v990, %v999
        %v1006 = vpack.c.bf16 %v1003, %v1000
        %v1007 = vpack.c.bf16 %v1004, %v1001
        %v1008 = vpack.c.bf16 %v1005, %v1002
        %1009 = vmatprep.subr.bf16.mxu0 0
        %1010 = vmatpush1.bf16.msra.mxu0 %v470
        %1011 = vmatprep.subr.bf16.mxu0 0
        %1012 = vmatpush1.bf16.msra.mxu0 %v469
        %1013 = vmatprep.subr.bf16.mxu0 0
        %1014 = vmatpush1.bf16.msra.mxu0 %v468
        %1015 = vmatprep.subr.bf16.mxu0 0
        %1016 = vmatpush1.bf16.msra.mxu0 %v467
        %1017 = vmatprep.subr.bf16.mxu0 0
        %1018 = vmatpush1.bf16.msra.mxu0 %v466
        %1019 = vmatprep.subr.bf16.mxu0 0
        %1020 = vmatpush1.bf16.msra.mxu0 %v465
        %1021 = vmatprep.subr.bf16.mxu0 0
        %1022 = vmatpush1.bf16.msra.mxu0 %v464
        %1023 = vmatprep.subr.bf16.mxu0 0
        %1024 = vmatpush1.bf16.msra.mxu0 %v463
        %1025 = vmatprep.subr.bf16.mxu0 0
        %1026 = vmatpush2.bf16.msra.mxu0 %v478
        %1027 = vmatprep.subr.bf16.mxu0 0
        %1028 = vmatpush2.bf16.msra.mxu0 %v477
        %1029 = vmatprep.subr.bf16.mxu0 0
        %1030 = vmatpush2.bf16.msra.mxu0 %v476
        %1031 = vmatprep.subr.bf16.mxu0 0
        %1032 = vmatpush2.bf16.msra.mxu0 %v475
        %1033 = vmatprep.subr.bf16.mxu0 0
        %1034 = vmatpush2.bf16.msra.mxu0 %v474
        %1035 = vmatprep.subr.bf16.mxu0 0
        %1036 = vmatpush2.bf16.msra.mxu0 %v473
        %1037 = vmatprep.subr.bf16.mxu0 0
        %1038 = vmatpush2.bf16.msra.mxu0 %v472
        %1039 = vmatprep.subr.bf16.mxu0 0
        %1040 = vmatpush2.bf16.msra.mxu0 %v471
        %1041 = vmatprep.mubr.bf16.mxu0 %v1007
        %1042 = vmatmul.mubr.bf16.gmra.mxu0 %v1006
        %v1043 = vpop.f32.mrf.mxu0
        %v1044 = vadd.f32 0.0, %v1043
        %v1045 = vpop.f32.mrf.mxu0
        %v1046 = vpop.f32.mrf.mxu0
        %v1047 = vadd.f32 0.0, %v1046
        %v1048 = vpop.f32.mrf.mxu0
        %1049 = vdwg.mxu0
        %1050 = vmatprep.subr.bf16.mxu0 0
        %1051 = vmatpush1.bf16.msra.mxu0 %v486
        %1052 = vmatprep.subr.bf16.mxu0 0
        %1053 = vmatpush1.bf16.msra.mxu0 %v485
        %1054 = vmatprep.subr.bf16.mxu0 0
        %1055 = vmatpush1.bf16.msra.mxu0 %v484
        %1056 = vmatprep.subr.bf16.mxu0 0
        %1057 = vmatpush1.bf16.msra.mxu0 %v483
        %1058 = vmatprep.subr.bf16.mxu0 0
        %1059 = vmatpush1.bf16.msra.mxu0 %v482
        %1060 = vmatprep.subr.bf16.mxu0 0
        %1061 = vmatpush1.bf16.msra.mxu0 %v481
        %1062 = vmatprep.subr.bf16.mxu0 0
        %1063 = vmatpush1.bf16.msra.mxu0 %v480
        %1064 = vmatprep.subr.bf16.mxu0 0
        %1065 = vmatpush1.bf16.msra.mxu0 %v479
        %1066 = vmatprep.subr.bf16.mxu0 0
        %1067 = vmatpush2.bf16.msra.mxu0 0
        %1068 = vmatprep.subr.bf16.mxu0 0
        %1069 = vmatpush2.bf16.msra.mxu0 0
        %1070 = vmatprep.subr.bf16.mxu0 0
        %1071 = vmatpush2.bf16.msra.mxu0 0
        %1072 = vmatprep.subr.bf16.mxu0 0
        %1073 = vmatpush2.bf16.msra.mxu0 0
        %1074 = vmatprep.subr.bf16.mxu0 0
        %1075 = vmatpush2.bf16.msra.mxu0 0
        %1076 = vmatprep.subr.bf16.mxu0 0
        %1077 = vmatpush2.bf16.msra.mxu0 0
        %1078 = vmatprep.subr.bf16.mxu0 0
        %1079 = vmatpush2.bf16.msra.mxu0 0
        %1080 = vmatprep.subr.bf16.mxu0 0
        %1081 = vmatpush2.bf16.msra.mxu0 0
        %1082 = vmatprep.mubr.bf16.mxu0 0
        %1083 = vmatmul.mubr.bf16.gmra.mxu0 %v1008
        %v1084 = vpop.f32.mrf.mxu0
        %v1085 = vadd.f32 %v1044, %v1084
        %v1086 = vpop.f32.mrf.mxu0
        %v1087 = vpop.f32.mrf.mxu0
        %v1088 = vadd.f32 %v1047, %v1087
        %v1089 = vpop.f32.mrf.mxu0
        %1090 = vdwg.mxu0
        %1091 = vmatprep.subr.bf16.mxu0 0
        %1092 = vmatpush1.bf16.msra.mxu0 %v470
        %1093 = vmatprep.subr.bf16.mxu0 0
        %1094 = vmatpush1.bf16.msra.mxu0 %v469
        %1095 = vmatprep.subr.bf16.mxu0 0
        %1096 = vmatpush1.bf16.msra.mxu0 %v468
        %1097 = vmatprep.subr.bf16.mxu0 0
        %1098 = vmatpush1.bf16.msra.mxu0 %v467
        %1099 = vmatprep.subr.bf16.mxu0 0
        %1100 = vmatpush1.bf16.msra.mxu0 %v466
        %1101 = vmatprep.subr.bf16.mxu0 0
        %1102 = vmatpush1.bf16.msra.mxu0 %v465
        %1103 = vmatprep.subr.bf16.mxu0 0
        %1104 = vmatpush1.bf16.msra.mxu0 %v464
        %1105 = vmatprep.subr.bf16.mxu0 0
        %1106 = vmatpush1.bf16.msra.mxu0 %v463
        %1107 = vmatprep.subr.bf16.mxu0 0
        %1108 = vmatpush2.bf16.msra.mxu0 %v478
        %1109 = vmatprep.subr.bf16.mxu0 0
        %1110 = vmatpush2.bf16.msra.mxu0 %v477
        %1111 = vmatprep.subr.bf16.mxu0 0
        %1112 = vmatpush2.bf16.msra.mxu0 %v476
        %1113 = vmatprep.subr.bf16.mxu0 0
        %1114 = vmatpush2.bf16.msra.mxu0 %v475
        %1115 = vmatprep.subr.bf16.mxu0 0
        %1116 = vmatpush2.bf16.msra.mxu0 %v474
        %1117 = vmatprep.subr.bf16.mxu0 0
        %1118 = vmatpush2.bf16.msra.mxu0 %v473
        %1119 = vmatprep.subr.bf16.mxu0 0
        %1120 = vmatpush2.bf16.msra.mxu0 %v472
        %1121 = vmatprep.subr.bf16.mxu0 0
        %1122 = vmatpush2.bf16.msra.mxu0 %v471
        %1123 = vmatprep.mubr.bf16.mxu0 %v992
        %1124 = vmatmul.mubr.bf16.gmra.mxu0 %v991
        %v1125 = vpop.f32.mrf.mxu0
        %v1126 = vadd.f32 %v1085, %v1125
        %v1127 = vpop.f32.mrf.mxu0
        %v1128 = vpop.f32.mrf.mxu0
        %v1129 = vadd.f32 %v1088, %v1128
        %v1130 = vpop.f32.mrf.mxu0
        %1131 = vdwg.mxu0
        %1132 = vmatprep.subr.bf16.mxu0 0
        %1133 = vmatpush1.bf16.msra.mxu0 %v486
        %1134 = vmatprep.subr.bf16.mxu0 0
        %1135 = vmatpush1.bf16.msra.mxu0 %v485
        %1136 = vmatprep.subr.bf16.mxu0 0
        %1137 = vmatpush1.bf16.msra.mxu0 %v484
        %1138 = vmatprep.subr.bf16.mxu0 0
        %1139 = vmatpush1.bf16.msra.mxu0 %v483
        %1140 = vmatprep.subr.bf16.mxu0 0
        %1141 = vmatpush1.bf16.msra.mxu0 %v482
        %1142 = vmatprep.subr.bf16.mxu0 0
        %1143 = vmatpush1.bf16.msra.mxu0 %v481
        %1144 = vmatprep.subr.bf16.mxu0 0
        %1145 = vmatpush1.bf16.msra.mxu0 %v480
        %1146 = vmatprep.subr.bf16.mxu0 0
        %1147 = vmatpush1.bf16.msra.mxu0 %v479
        %1148 = vmatprep.subr.bf16.mxu0 0
        %1149 = vmatpush2.bf16.msra.mxu0 0
        %1150 = vmatprep.subr.bf16.mxu0 0
        %1151 = vmatpush2.bf16.msra.mxu0 0
        %1152 = vmatprep.subr.bf16.mxu0 0
        %1153 = vmatpush2.bf16.msra.mxu0 0
        %1154 = vmatprep.subr.bf16.mxu0 0
        %1155 = vmatpush2.bf16.msra.mxu0 0
        %1156 = vmatprep.subr.bf16.mxu0 0
        %1157 = vmatpush2.bf16.msra.mxu0 0
        %1158 = vmatprep.subr.bf16.mxu0 0
        %1159 = vmatpush2.bf16.msra.mxu0 0
        %1160 = vmatprep.subr.bf16.mxu0 0
        %1161 = vmatpush2.bf16.msra.mxu0 0
        %1162 = vmatprep.subr.bf16.mxu0 0
        %1163 = vmatpush2.bf16.msra.mxu0 0
        %1164 = vmatprep.mubr.bf16.mxu0 0
        %1165 = vmatmul.mubr.bf16.gmra.mxu0 %v993
        %v1166 = vpop.f32.mrf.mxu0
        %v1167 = vadd.f32 %v1126, %v1166
        %v1168 = vpop.f32.mrf.mxu0
        %v1169 = vpop.f32.mrf.mxu0
        %v1170 = vadd.f32 %v1129, %v1169
        %v1171 = vpop.f32.mrf.mxu0
        %1172 = vdwg.mxu0
        %v1173 = vmul.f32 %v1167, 0.020833334
        %v1174 = vmul.f32 %v1170, 0.020833334
        %v1175 = vadd.f32 %v1173, 1e-05
        %v1176 = vadd.f32 %v1174, 1e-05
        %v1177 = vrsqrt.pop %v1175
        %v1178 = vrsqrt.pop %v1176
        %v1179 = vpack.c.bf16 %v1178, %v1177
        %v1180 = vunpack.c.l.bf16 %v1179
        %v1181 = vunpack.c.h.bf16 %v1179
        %v1182 = vsub.f32 %v1177, %v1180
        %v1183 = vsub.f32 %v1178, %v1181
        %v1184 = vpack.c.bf16 %v1183, %v1182
        %1185 = vmatprep.subr.bf16.mxu0 %v785
        %1186 = vmatpush1.bf16.msra.mxu0 %v784
        %1187 = vmatprep.subr.bf16.mxu0 %v782
        %1188 = vmatpush1.bf16.msra.mxu0 %v781
        %1189 = vmatprep.subr.bf16.mxu0 %v779
        %1190 = vmatpush1.bf16.msra.mxu0 %v778
        %1191 = vmatprep.subr.bf16.mxu0 %v776
        %1192 = vmatpush1.bf16.msra.mxu0 %v775
        %1193 = vmatprep.subr.bf16.mxu0 %v773
        %1194 = vmatpush1.bf16.msra.mxu0 %v772
        %1195 = vmatprep.subr.bf16.mxu0 %v770
        %1196 = vmatpush1.bf16.msra.mxu0 %v769
        %1197 = vmatprep.subr.bf16.mxu0 %v767
        %1198 = vmatpush1.bf16.msra.mxu0 %v766
        %1199 = vmatprep.subr.bf16.mxu0 %v764
        %1200 = vmatpush1.bf16.msra.mxu0 %v763
        %1201 = vmatprep.subr.bf16.mxu0 0
        %1202 = vmatpush2.bf16.msra.mxu0 0
        %1203 = vmatprep.subr.bf16.mxu0 0
        %1204 = vmatpush2.bf16.msra.mxu0 0
        %1205 = vmatprep.subr.bf16.mxu0 0
        %1206 = vmatpush2.bf16.msra.mxu0 0
        %1207 = vmatprep.subr.bf16.mxu0 0
        %1208 = vmatpush2.bf16.msra.mxu0 0
        %1209 = vmatprep.subr.bf16.mxu0 0
        %1210 = vmatpush2.bf16.msra.mxu0 0
        %1211 = vmatprep.subr.bf16.mxu0 0
        %1212 = vmatpush2.bf16.msra.mxu0 0
        %1213 = vmatprep.subr.bf16.mxu0 0
        %1214 = vmatpush2.bf16.msra.mxu0 0
        %1215 = vmatprep.subr.bf16.mxu0 0
        %1216 = vmatpush2.bf16.msra.mxu0 0
        %1217 = vmatprep.mubr.bf16.mxu0 0
        %1218 = vmatmul.mubr.bf16.gmra.mxu0 %v1184
        %v1219 = vpop.f32.mrf.mxu0
        %v1220 = vadd.f32 0.0, %v1219
        %v1221 = vpop.f32.mrf.mxu0
        %v1222 = vadd.f32 0.0, %v1221
        %v1223 = vpop.f32.mrf.mxu0
        %v1224 = vadd.f32 0.0, %v1223
        %v1225 = vpop.f32.mrf.mxu0
        %v1226 = vadd.f32 0.0, %v1225
        %1227 = vdwg.mxu0
        %1228 = vmatprep.subr.bf16.mxu0 0
        %1229 = vmatpush1.bf16.msra.mxu0 %v786
        %1230 = vmatprep.subr.bf16.mxu0 0
        %1231 = vmatpush1.bf16.msra.mxu0 %v783
        %1232 = vmatprep.subr.bf16.mxu0 0
        %1233 = vmatpush1.bf16.msra.mxu0 %v780
        %1234 = vmatprep.subr.bf16.mxu0 0
        %1235 = vmatpush1.bf16.msra.mxu0 %v777
        %1236 = vmatprep.subr.bf16.mxu0 0
        %1237 = vmatpush1.bf16.msra.mxu0 %v774
        %1238 = vmatprep.subr.bf16.mxu0 0
        %1239 = vmatpush1.bf16.msra.mxu0 %v771
        %1240 = vmatprep.subr.bf16.mxu0 0
        %1241 = vmatpush1.bf16.msra.mxu0 %v768
        %1242 = vmatprep.subr.bf16.mxu0 0
        %1243 = vmatpush1.bf16.msra.mxu0 %v765
        %1244 = vmatprep.subr.bf16.mxu0 0
        %1245 = vmatpush2.bf16.msra.mxu0 0
        %1246 = vmatprep.subr.bf16.mxu0 0
        %1247 = vmatpush2.bf16.msra.mxu0 0
        %1248 = vmatprep.subr.bf16.mxu0 0
        %1249 = vmatpush2.bf16.msra.mxu0 0
        %1250 = vmatprep.subr.bf16.mxu0 0
        %1251 = vmatpush2.bf16.msra.mxu0 0
        %1252 = vmatprep.subr.bf16.mxu0 0
        %1253 = vmatpush2.bf16.msra.mxu0 0
        %1254 = vmatprep.subr.bf16.mxu0 0
        %1255 = vmatpush2.bf16.msra.mxu0 0
        %1256 = vmatprep.subr.bf16.mxu0 0
        %1257 = vmatpush2.bf16.msra.mxu0 0
        %1258 = vmatprep.subr.bf16.mxu0 0
        %1259 = vmatpush2.bf16.msra.mxu0 0
        %1260 = vmatprep.mubr.bf16.mxu0 0
        %1261 = vmatmul.mubr.bf16.gmra.mxu0 %v1184
        %v1262 = vpop.f32.mrf.mxu0
        %v1263 = vadd.f32 0.0, %v1262
        %v1264 = vpop.f32.mrf.mxu0
        %v1265 = vpop.f32.mrf.mxu0
        %v1266 = vadd.f32 0.0, %v1265
        %v1267 = vpop.f32.mrf.mxu0
        %1268 = vdwg.mxu0
        %1269 = vmatprep.subr.bf16.mxu0 %v785
        %1270 = vmatpush1.bf16.msra.mxu0 %v784
        %1271 = vmatprep.subr.bf16.mxu0 %v782
        %1272 = vmatpush1.bf16.msra.mxu0 %v781
        %1273 = vmatprep.subr.bf16.mxu0 %v779
        %1274 = vmatpush1.bf16.msra.mxu0 %v778
        %1275 = vmatprep.subr.bf16.mxu0 %v776
        %1276 = vmatpush1.bf16.msra.mxu0 %v775
        %1277 = vmatprep.subr.bf16.mxu0 %v773
        %1278 = vmatpush1.bf16.msra.mxu0 %v772
        %1279 = vmatprep.subr.bf16.mxu0 %v770
        %1280 = vmatpush1.bf16.msra.mxu0 %v769
        %1281 = vmatprep.subr.bf16.mxu0 %v767
        %1282 = vmatpush1.bf16.msra.mxu0 %v766
        %1283 = vmatprep.subr.bf16.mxu0 %v764
        %1284 = vmatpush1.bf16.msra.mxu0 %v763
        %1285 = vmatprep.subr.bf16.mxu0 0
        %1286 = vmatpush2.bf16.msra.mxu0 0
        %1287 = vmatprep.subr.bf16.mxu0 0
        %1288 = vmatpush2.bf16.msra.mxu0 0
        %1289 = vmatprep.subr.bf16.mxu0 0
        %1290 = vmatpush2.bf16.msra.mxu0 0
        %1291 = vmatprep.subr.bf16.mxu0 0
        %1292 = vmatpush2.bf16.msra.mxu0 0
        %1293 = vmatprep.subr.bf16.mxu0 0
        %1294 = vmatpush2.bf16.msra.mxu0 0
        %1295 = vmatprep.subr.bf16.mxu0 0
        %1296 = vmatpush2.bf16.msra.mxu0 0
        %1297 = vmatprep.subr.bf16.mxu0 0
        %1298 = vmatpush2.bf16.msra.mxu0 0
        %1299 = vmatprep.subr.bf16.mxu0 0
        %1300 = vmatpush2.bf16.msra.mxu0 0
        %1301 = vmatprep.mubr.bf16.mxu0 0
        %1302 = vmatmul.mubr.bf16.gmra.mxu0 %v1179
        %v1303 = vpop.f32.mrf.mxu0
        %v1304 = vadd.f32 %v1220, %v1303
        %v1305 = vpop.f32.mrf.mxu0
        %v1306 = vadd.f32 %v1222, %v1305
        %v1307 = vpop.f32.mrf.mxu0
        %v1308 = vadd.f32 %v1224, %v1307
        %v1309 = vpop.f32.mrf.mxu0
        %v1310 = vadd.f32 %v1226, %v1309
        %1311 = vdwg.mxu0
        %1312 = vmatprep.subr.bf16.mxu0 0
        %1313 = vmatpush1.bf16.msra.mxu0 %v786
        %1314 = vmatprep.subr.bf16.mxu0 0
        %1315 = vmatpush1.bf16.msra.mxu0 %v783
        %1316 = vmatprep.subr.bf16.mxu0 0
        %1317 = vmatpush1.bf16.msra.mxu0 %v780
        %1318 = vmatprep.subr.bf16.mxu0 0
        %1319 = vmatpush1.bf16.msra.mxu0 %v777
        %1320 = vmatprep.subr.bf16.mxu0 0
        %1321 = vmatpush1.bf16.msra.mxu0 %v774
        %1322 = vmatprep.subr.bf16.mxu0 0
        %1323 = vmatpush1.bf16.msra.mxu0 %v771
        %1324 = vmatprep.subr.bf16.mxu0 0
        %1325 = vmatpush1.bf16.msra.mxu0 %v768
        %1326 = vmatprep.subr.bf16.mxu0 0
        %1327 = vmatpush1.bf16.msra.mxu0 %v765
        %1328 = vmatprep.subr.bf16.mxu0 0
        %1329 = vmatpush2.bf16.msra.mxu0 0
        %1330 = vmatprep.subr.bf16.mxu0 0
        %1331 = vmatpush2.bf16.msra.mxu0 0
        %1332 = vmatprep.subr.bf16.mxu0 0
        %1333 = vmatpush2.bf16.msra.mxu0 0
        %1334 = vmatprep.subr.bf16.mxu0 0
        %1335 = vmatpush2.bf16.msra.mxu0 0
        %1336 = vmatprep.subr.bf16.mxu0 0
        %1337 = vmatpush2.bf16.msra.mxu0 0
        %1338 = vmatprep.subr.bf16.mxu0 0
        %1339 = vmatpush2.bf16.msra.mxu0 0
        %1340 = vmatprep.subr.bf16.mxu0 0
        %1341 = vmatpush2.bf16.msra.mxu0 0
        %1342 = vmatprep.subr.bf16.mxu0 0
        %1343 = vmatpush2.bf16.msra.mxu0 0
        %1344 = vmatprep.mubr.bf16.mxu0 0
        %1345 = vmatmul.mubr.bf16.gmra.mxu0 %v1179
        %v1346 = vpop.f32.mrf.mxu0
        %v1347 = vadd.f32 %v1263, %v1346
        %v1348 = vpop.f32.mrf.mxu0
        %v1349 = vpop.f32.mrf.mxu0
        %v1350 = vadd.f32 %v1266, %v1349
        %v1351 = vpop.f32.mrf.mxu0
        %1352 = vdwg.mxu0
        %v1353 = vmul.f32 %v262, %v1304
        %v1354 = vmul.f32 %v263, %v1306
        %v1355 = vmul.f32 %v264, %v1347
        %v1356 = vmul.f32 %v265, %v1308
        %v1357 = vmul.f32 %v266, %v1310
        %v1358 = vmul.f32 %v267, %v1350
        %v1360 = vlaneseq
        %v1361 = vshrl.u32 %v1360, 7
        %v1362 = vsub.s32 0, %v1361
        %v1363 = vrot.slane %v268, %v1362
        %v1364 = vlaneseq
        %v1365 = vshrl.u32 %v1364, 7
        %v1366 = vsub.s32 1, %v1365
        %v1367 = vrot.slane %v268, %v1366
        %v1368 = vlaneseq
        %v1369 = vshrl.u32 %v1368, 7
        %v1370 = vsub.s32 2, %v1369
        %v1371 = vrot.slane %v268, %v1370
        %v1375 = vmul.f32 %v1353, %v1363
        %v1376 = vmul.f32 %v1354, %v1367
        %v1377 = vmul.f32 %v1355, %v1371
        %v1378 = vmul.f32 %v1356, %v1363
        %v1379 = vmul.f32 %v1357, %v1367
        %v1380 = vmul.f32 %v1358, %v1371
        %1381 = vst [vmem:[%s258] sm:$0xff] %v1375
        %1382 = vst [vmem:[%s258 + $0x8] sm:$0xff] %v1376
        %1383 = vst [vmem:[%s258 + $0x10] sm:$0xff] %v1377
        %1384 = vst [vmem:[%s258 + $0x18] sm:$0xff] %v1378
        %1385 = vst [vmem:[%s258 + $0x20] sm:$0xff] %v1379
        %1386 = vst [vmem:[%s258 + $0x28] sm:$0xff] %v1380
        %s1387 = sand.u32 %s120, 1
        %s1388 = scalar_lea.sflag [#allocation4], %s1387
        %s1389 = sand.u32 %s120, 1
        %s1390 = smul.addr %s1389, 48
        %s1391 = scalar_lea.vmem [#allocation10], %s1390
        // Predicated region
        $region53: #{tpu_custom_call.1} parent=35 // pred_check
          %p1392 = pneg %p130
        $region54: #{tpu_custom_call.1} parent=35 // pred_check_branch
          %1394 = sbr.rel (%p1392) target = $region56
        $region55: #{tpu_custom_call.1} parent=35 // pred_region
          %s1395 = smul.u32 2, %s23
          %s1397 = ssub.s32 768, 768
          %1398 = vsyncadd %s1388, %s1397
          %s1399 = smul.addr %s1395, 3
          %s1400 = smul.addr %s1399, 128
          %s1401 = scalar_lea.hbm %s4, %s1400
          %s1402 = sshll.u32 %s1391, 4
          %s1403 = int_to_ptr.vmem [resolvable:$true] %s1402
          %1408 = dma.vmem_to_hbm [thread:$0]  %s1403, 768, %s1401, %s1388, 384, 384, 24
        $region56: #{tpu_custom_call.1} parent=35 // pred_fallthru
          _
      $region36: #{tpu_custom_call.1} parent=5 // pred_fallthru
        _
      %p1409 = scmp.le.s32.totalorder 2, %s18
      // Predicated region
      $region57: #{tpu_custom_call.1} parent=5 // pred_check
        %p1410 = pneg %p1409
      $region58: #{tpu_custom_call.1} parent=5 // pred_check_branch
        %1412 = sbr.rel (%p1410) target = $region60
      $region59: #{tpu_custom_call.1} parent=5 // pred_region
        %s1413 = ssub.s32 %s18, 2
        // Predicated region
        $region61: #{tpu_custom_call.1} parent=59 // pred_check
          %p1414 = pneg %p136
        $region62: #{tpu_custom_call.1} parent=59 // pred_check_branch
          %1416 = sbr.rel (%p1414) target = $region64
        $region63: #{tpu_custom_call.1} parent=59 // pred_region
          %s1417 = sand.u32 %s121, 1
          %s1418 = scalar_lea.sflag [#allocation4], %s1417
          %s1419 = sand.u32 %s121, 1
          %s1420 = smul.addr %s1419, 48
          %s1421 = scalar_lea.vmem [#allocation10], %s1420
          %1422 = dma.done %s1418, 768
        $region64: #{tpu_custom_call.1} parent=59 // pred_fallthru
          _
      $region60: #{tpu_custom_call.1} parent=5 // pred_fallthru
        _
    $region6: #{tpu_custom_call.1} parent=1 // loop_footer
      %s22 = sadd.s32 1, %s18
    $region7: #{tpu_custom_call.1} parent=1 // loop_footer_branch
      %17 = sbr.rel target = $region3
    $region8: #{tpu_custom_call.1} parent=1 // loop_exit
      _
    %1423 = vsyncpa [#allocation3], 1
    %s1424 = scalar_lea.sflag [#allocation3], 1
    %1425 = vsyncpa %s1424, 1
    %1426 = vsyncpa [#allocation6], 1
    %1427 = vsyncpa [#allocation9], 1
    %1428 = vsyncpa [#allocation4], 1
    %s1429 = scalar_lea.sflag [#allocation4], 1
    %1430 = vsyncpa %s1429, 1

</llo_original>
